<compile_context>
chip_gen: v7x
topology: tpu7x:2x2x1
jax: 0.10.0
libtpu: 0.0.40
codegen_flags: <defaults>
</compile_context>

<pallas_src>
import jax
import jax.numpy as jnp
import numpy as np
from jax.experimental import pallas as pl
from jax.experimental.pallas import tpu as pltpu

EPS = 1e-5
K = 7            # packed conv kernel size (1x1/3x3/5x5/7x7 branches embedded, zero-padded)
PAD = K // 2
APPROX_SIGMOID = True   # EUP vrcp reciprocal in the sigmoid (tiny systematic error); set
                        # False for an exact divide.


def _sigmoid(x):
    if APPROX_SIGMOID:
        return pl.reciprocal(1.0 + jnp.exp(-x), approx=True)
    return 1.0 / (1.0 + jnp.exp(-x))


# ---------------------------------------------------------------------------
# Kernel A: multi-scale conv = one lane-dense MXU matmul per image
#           (C, KKCpad) @ (KKCpad, HW) -> (C, HW), plus fused BN partial stats.
# ---------------------------------------------------------------------------
def _conv_stats_kernel(pt_ref, wt_ref, o_ref, sum_ref, sq_ref):
    acc = jnp.dot(wt_ref[...], pt_ref[...],
                  preferred_element_type=jnp.float32)        # (C, HW) f32
    o_ref[...] = acc.astype(o_ref.dtype)                     # bf16 slab to HBM
    # fused BatchNorm partial statistics (per channel = per sublane row)
    sum_ref[...] = jnp.sum(acc, axis=1, keepdims=True)       # (C, 1)
    sq_ref[...] = jnp.sum(acc * acc, axis=1, keepdims=True)  # (C, 1)


# ---------------------------------------------------------------------------
# Kernel B: BN (precomputed scale/shift) + ReLU + channel attention + spatial
#           attention, fully in the lane-dense (C, HW) layout, one image per step.
# ---------------------------------------------------------------------------
def _bn_cbam_kernel(y_ref, scale_ref, shift_ref, w1t_ref, w2t_ref,
                    mmean_ref, mmax_ref, o_ref):
    # --- BatchNorm (folded scale/shift) + ReLU ---
    y = y_ref[...].astype(jnp.float32)                       # (C, HW)
    yr = jnp.maximum(y * scale_ref[...] + shift_ref[...], 0.0)

    # --- Channel attention (column orientation: pooled vectors are (C, 1)) ---
    avg = jnp.mean(yr, axis=1, keepdims=True)                # (C, 1)
    mxp = jnp.max(yr, axis=1, keepdims=True)                 # (C, 1)
    w1t = w1t_ref[...]                                       # (Cr, C)
    w2t = w2t_ref[...]                                       # (C, Cr)

    def fc(col):                                             # (C,1) -> (C,1)
        h = jnp.maximum(jnp.dot(w1t, col, preferred_element_type=jnp.float32), 0.0)
        return jnp.dot(w2t, h, preferred_element_type=jnp.float32)

    ca = _sigmoid(fc(avg) + fc(mxp))                         # (C, 1)
    yca = yr * ca                                            # (C, HW)

    # --- Spatial attention: 7x7 conv over [mean_c, max_c] as two dense matmuls ---
    sa_mean = jnp.mean(yca, axis=0, keepdims=True).astype(jnp.bfloat16)   # (1, HW)
    sa_max = jnp.max(yca, axis=0, keepdims=True).astype(jnp.bfloat16)     # (1, HW)
    logits = (jnp.dot(sa_mean, mmean_ref[...], preferred_element_type=jnp.float32)
              + jnp.dot(sa_max, mmax_ref[...], preferred_element_type=jnp.float32))
    sa = _sigmoid(logits)                                    # (1, HW)

    o_ref[...] = yca * sa                                    # sublane broadcast, lane-dense


# ---------------------------------------------------------------------------
# Wrapper (accepts NCHW like the PyTorch module, returns NCHW).
# ---------------------------------------------------------------------------
def multiscale_feature_extractor(x_nchw, params):
    N, Cin, H, W = x_nchw.shape
    C = params["bn_gamma"].shape[-1]
    HW = H * W
    KKC = K * K * Cin
    KKCpad = params["wT_bf16"].shape[-1]
    Cr = params["ca_w1t"].shape[0]

    # ---- wrapper-side im2col (layout plumbing, bf16 before the DMA) ----
    x_pad = jnp.pad(x_nchw.astype(jnp.float32),
                    ((0, 0), (0, 0), (PAD, PAD), (PAD, PAD)))
    taps = [x_pad[:, :, kh:kh + H, kw:kw + W].reshape(N, Cin, HW)
            for kh in range(K) for kw in range(K)]
    patches = jnp.concatenate(taps, axis=1)                  # (N, KKC, HW), row order (kh,kw,cin)
    patches = jnp.pad(patches, ((0, 0), (0, KKCpad - KKC), (0, 0))).astype(jnp.bfloat16)

    conv_out, sums, sqs = pl.pallas_call(
        _conv_stats_kernel,
        out_shape=(jax.ShapeDtypeStruct((N, C, HW), jnp.bfloat16),
                   jax.ShapeDtypeStruct((N, C, 1), jnp.float32),
                   jax.ShapeDtypeStruct((N, C, 1), jnp.float32)),
        grid=(N,),
        in_specs=[
            pl.BlockSpec((None, KKCpad, HW), lambda n: (n, 0, 0)),
            pl.BlockSpec((C, KKCpad), lambda n: (0, 0)),
        ],
        out_specs=(pl.BlockSpec((None, C, HW), lambda n: (n, 0, 0)),
                   pl.BlockSpec((None, C, 1), lambda n: (n, 0, 0)),
                   pl.BlockSpec((None, C, 1), lambda n: (n, 0, 0))),
        compiler_params=pltpu.CompilerParams(dimension_semantics=("parallel",)),
    )(patches, params["wT_bf16"])

    # ---- tiny jnp glue: fold per-image partials into BN scale/shift columns ----
    cnt = float(N * HW)
    mean = jnp.sum(sums, axis=0) / cnt                       # (C, 1)
    ex2 = jnp.sum(sqs, axis=0) / cnt
    var = jnp.maximum(ex2 - mean * mean, 0.0)
    gamma = params["bn_gamma"].reshape(C, 1)
    beta = params["bn_beta"].reshape(C, 1)
    scale = gamma * jax.lax.rsqrt(var + EPS)                 # (C, 1)
    shift = beta - mean * scale                              # (C, 1)

    out = pl.pallas_call(
        _bn_cbam_kernel,
        out_shape=jax.ShapeDtypeStruct((N, C, HW), jnp.float32),
        grid=(N,),
        in_specs=[
            pl.BlockSpec((None, C, HW), lambda n: (n, 0, 0)),     # conv_out (bf16)
            pl.BlockSpec((C, 1), lambda n: (0, 0)),               # BN scale
            pl.BlockSpec((C, 1), lambda n: (0, 0)),               # BN shift
            pl.BlockSpec((Cr, C), lambda n: (0, 0)),              # CA fc1 (transposed)
            pl.BlockSpec((C, Cr), lambda n: (0, 0)),              # CA fc2 (transposed)
            pl.BlockSpec((HW, HW), lambda n: (0, 0)),             # SA conv matrix (mean ch)
            pl.BlockSpec((HW, HW), lambda n: (0, 0)),             # SA conv matrix (max ch)
        ],
        out_specs=pl.BlockSpec((None, C, HW), lambda n: (n, 0, 0)),
        compiler_params=pltpu.CompilerParams(dimension_semantics=("parallel",)),
    )(conv_out, scale, shift, params["ca_w1t"], params["ca_w2t"],
      params["sa_m_mean"], params["sa_m_max"])

    return out.reshape(N, C, H, W)                           # (N, C, HW) is natively NCHW


# ---------------------------------------------------------------------------
# Derived-weight construction.
# ---------------------------------------------------------------------------
def _make_sa_matrices(sa_w_hwio, H, W):
    """Dense conv matrices for the 7x7 spatial-attention conv (zero padding baked in).

    M[ch][q, p] = w[qh - ph + PAD, qw - pw + PAD, ch] if that tap is inside the 7x7
    window, else 0 — so logits[p] = sum_q mean[q]*M[0][q,p] + max[q]*M[1][q,p].
    """
    w = np.asarray(sa_w_hwio)[..., 0]                        # (K, K, 2)
    HW = H * W
    pos = np.arange(HW)
    qh, qw = pos // W, pos % W
    dh = qh[:, None] - qh[None, :] + PAD                     # (HW, HW)
    dw = qw[:, None] - qw[None, :] + PAD
    valid = (dh >= 0) & (dh < K) & (dw >= 0) & (dw < K)
    g = w[np.clip(dh, 0, K - 1), np.clip(dw, 0, K - 1)]      # (HW, HW, 2)
    m = np.where(valid[..., None], g, 0.0).astype(np.float32)
    return m[..., 0], m[..., 1]


def init_params(key, in_channels, out_channels, H, W):
    C, C4, Cr = out_channels, out_channels // 4, out_channels // 16
    ks = jax.random.split(key, 13)

    def nrm(k, shape, scl):
        return scl * jax.random.normal(k, shape, jnp.float32)

    w1 = nrm(ks[0], (1, 1, in_channels, C4), 0.25)
    w3 = nrm(ks[1], (3, 3, in_channels, C4), 0.15)
    w5 = nrm(ks[2], (5, 5, in_channels, C4), 0.08)
    w7 = nrm(ks[3], (7, 7, in_channels, C4), 0.05)
    b1, b3 = nrm(ks[4], (C4,), 0.1), nrm(ks[5], (C4,), 0.1)
    b5, b7 = nrm(ks[6], (C4,), 0.1), nrm(ks[7], (C4,), 0.1)

    # pack the four branches (centered, zero padded) into one 7x7 HWIO weight
    wp = jnp.zeros((K, K, in_channels, C), jnp.float32)
    wp = wp.at[3:4, 3:4, :, 0:C4].set(w1)
    wp = wp.at[2:5, 2:5, :, C4:2 * C4].set(w3)
    wp = wp.at[1:6, 1:6, :, 2 * C4:3 * C4].set(w5)
    wp = wp.at[:, :, :, 3 * C4:].set(w7)

    bn_gamma = 1.0 + nrm(ks[8], (1, C), 0.1)
    bn_beta = nrm(ks[9], (1, C), 0.1)
    ca_w1 = nrm(ks[10], (C, Cr), 0.3)
    ca_w2 = nrm(ks[11], (Cr, C), 0.3)
    sa_w_hwio = nrm(ks[12], (K, K, 2, 1), 0.1)

    # derived kernel weights
    KKC = K * K * in_channels
    KKCpad = ((KKC + 127) // 128) * 128                      # pad contraction to 128-multiple
    wT = jnp.transpose(wp.reshape(KKC, C))                   # (C, KKC)
    wT = jnp.pad(wT, ((0, 0), (0, KKCpad - KKC)))
    m_mean, m_max = _make_sa_matrices(sa_w_hwio, H, W)

    return dict(
        # raw PyTorch-shaped weights (used by the reference)
        w1=w1, w3=w3, w5=w5, w7=w7, b1=b1, b3=b3, b5=b5, b7=b7,
        bn_gamma=bn_gamma, bn_beta=bn_beta,
        ca_w1=ca_w1, ca_w2=ca_w2, sa_w_hwio=sa_w_hwio,
        # kernel-side derived weights
        # (conv biases are intentionally dropped: batch-stat BN cancels them exactly)
        wT_bf16=wT.astype(jnp.bfloat16),                     # (C, KKCpad)
        ca_w1t=jnp.transpose(ca_w1),                         # (Cr, C) f32
        ca_w2t=jnp.transpose(ca_w2),                         # (C, Cr) f32
        sa_m_mean=jnp.asarray(m_mean, jnp.bfloat16),         # (HW, HW)
        sa_m_max=jnp.asarray(m_max, jnp.bfloat16),           # (HW, HW)
    )


# ---------------------------------------------------------------------------
# Plain-JAX reference (numerical self-check).
# ---------------------------------------------------------------------------
def reference_forward(x_nchw, p):
    x = jnp.transpose(x_nchw, (0, 2, 3, 1)).astype(jnp.float32)

    def conv(xx, w, b, pad):
        y = jax.lax.conv_general_dilated(
            xx, w, (1, 1), [(pad, pad), (pad, pad)],
            dimension_numbers=("NHWC", "HWIO", "NHWC"))
        return y + b

    y = jnp.concatenate([conv(x, p["w1"], p["b1"], 0),
                         conv(x, p["w3"], p["b3"], 1),
                         conv(x, p["w5"], p["b5"], 2),
                         conv(x, p["w7"], p["b7"], 3)], axis=-1)
    m = jnp.mean(y, axis=(0, 1, 2), keepdims=True)
    v = jnp.mean(jnp.square(y - m), axis=(0, 1, 2), keepdims=True)
    y = (y - m) * jax.lax.rsqrt(v + EPS) * p["bn_gamma"].reshape(1, 1, 1, -1) \
        + p["bn_beta"].reshape(1, 1, 1, -1)
    y = jnp.maximum(y, 0.0)

    avg = jnp.mean(y, axis=(1, 2))
    mx = jnp.max(y, axis=(1, 2))

    def fc(q):
        return jnp.maximum(q @ p["ca_w1"], 0.0) @ p["ca_w2"]

    ca = jax.nn.sigmoid(fc(avg) + fc(mx))
    y = y * ca[:, None, None, :]

    s = jnp.concatenate([jnp.mean(y, -1, keepdims=True),
                         jnp.max(y, -1, keepdims=True)], axis=-1)
    s = jax.lax.conv_general_dilated(
        s, p["sa_w_hwio"], (1, 1), [(PAD, PAD), (PAD, PAD)],
        dimension_numbers=("NHWC", "HWIO", "NHWC"))
    y = y * jax.nn.sigmoid(s)
    return jnp.transpose(y, (0, 3, 1, 2))


if __name__ == "__main__":
    key = jax.random.PRNGKey(0)
    k_x, k_p = jax.random.split(key)
    N, Cin, H, W = 2, 4, 16, 16
    Cout = 32

    x = jax.random.normal(k_x, (N, Cin, H, W), jnp.float32)   # NCHW, like PyTorch
    params = init_params(k_p, Cin, Cout, H, W)

    fwd = jax.jit(multiscale_feature_extractor)
    out = jax.block_until_ready(fwd(x, params))
    assert out.shape == (N, Cout, H, W)

    ref = reference_forward(x, params)
    np.testing.assert_allclose(np.asarray(out), np.asarray(ref), rtol=3e-2, atol=3e-2)

    print("KERNEL_OK")
</pallas_src>

<mosaic_0001>
module attributes {stable_mosaic.version = 11 : i64} {
  func.func @_conv_stats_kernel(%arg0: i32, %arg1: memref<1x256x256xbf16, #tpu.memory_space<vmem>>, %arg2: memref<32x256xbf16, #tpu.memory_space<vmem>>, %arg3: memref<1x32x256xbf16, #tpu.memory_space<vmem>>, %arg4: memref<1x32x1xf32, #tpu.memory_space<vmem>>, %arg5: memref<1x32x1xf32, #tpu.memory_space<vmem>>) attributes {dimension_semantics = [#tpu.dimension_semantics<parallel>], iteration_bounds = array<i64: 2>, scalar_prefetch = 0 : i64, scratch_operands = 0 : i64, tpu.core_type = #tpu.core_type<tc>, window_params = [{transform_indices = @transform_0, window_bounds = array<i64: 1, 256, 256>}, {pipeline_mode = #tpu.pipeline_mode<synchronous>, transform_indices = @transform_1, window_bounds = array<i64: 32, 256>}, {transform_indices = @transform_2, window_bounds = array<i64: 1, 32, 256>}, {transform_indices = @transform_3, window_bounds = array<i64: 1, 32, 1>}, {transform_indices = @transform_4, window_bounds = array<i64: 1, 32, 1>}]} {
    %c0 = arith.constant 0 : index
    %c0_0 = arith.constant 0 : index
    %0 = vector.load %arg2[%c0, %c0_0] : memref<32x256xbf16, #tpu.memory_space<vmem>>, vector<32x256xbf16>
    %c0_1 = arith.constant 0 : index
    %c0_2 = arith.constant 0 : index
    %c0_3 = arith.constant 0 : index
    %1 = vector.load %arg1[%c0_1, %c0_2, %c0_3] : memref<1x256x256xbf16, #tpu.memory_space<vmem>>, vector<1x256x256xbf16>
    %2 = vector.shape_cast %1 : vector<1x256x256xbf16> to vector<256x256xbf16>
    %cst = arith.constant dense<0.000000e+00> : vector<32x256xf32>
    %3 = tpu.matmul %0, %2, %cst {dimension_numbers = #tpu.dot_dimension_numbers<[1], [0], [0], [1], [0, 0, 1, 1], [], []>} : vector<32x256xbf16>, vector<256x256xbf16>, vector<32x256xf32> -> vector<32x256xf32>
    %4 = arith.truncf %3 : vector<32x256xf32> to vector<32x256xbf16>
    %c0_4 = arith.constant 0 : index
    %c0_5 = arith.constant 0 : index
    %c0_6 = arith.constant 0 : index
    %5 = vector.load %arg3[%c0_4, %c0_5, %c0_6] : memref<1x32x256xbf16, #tpu.memory_space<vmem>>, vector<1x32x256xbf16>
    %6 = vector.shape_cast %5 : vector<1x32x256xbf16> to vector<32x256xbf16>
    %7 = vector.shape_cast %4 : vector<32x256xbf16> to vector<1x32x256xbf16>
    tpu.vector_store %arg3[%c0_4, %c0_5, %c0_6], %7 {strides = array<i32>} : memref<1x32x256xbf16, #tpu.memory_space<vmem>>, vector<1x32x256xbf16>,
    %cst_7 = arith.constant dense<0.000000e+00> : vector<32xf32>
    %8 = vector.multi_reduction <add>, %3, %cst_7 [1] : vector<32x256xf32> to vector<32xf32>
    %9 = vector.shape_cast %8 : vector<32xf32> to vector<32x1xf32>
    %c0_8 = arith.constant 0 : index
    %c0_9 = arith.constant 0 : index
    %c0_10 = arith.constant 0 : index
    %10 = vector.load %arg4[%c0_8, %c0_9, %c0_10] : memref<1x32x1xf32, #tpu.memory_space<vmem>>, vector<1x32x1xf32>
    %11 = vector.shape_cast %10 : vector<1x32x1xf32> to vector<32x1xf32>
    %12 = vector.shape_cast %9 : vector<32x1xf32> to vector<1x32x1xf32>
    tpu.vector_store %arg4[%c0_8, %c0_9, %c0_10], %12 {strides = array<i32>} : memref<1x32x1xf32, #tpu.memory_space<vmem>>, vector<1x32x1xf32>,
    %13 = arith.mulf %3, %3 : vector<32x256xf32>
    %cst_11 = arith.constant dense<0.000000e+00> : vector<32xf32>
    %14 = vector.multi_reduction <add>, %13, %cst_11 [1] : vector<32x256xf32> to vector<32xf32>
    %15 = vector.shape_cast %14 : vector<32xf32> to vector<32x1xf32>
    %c0_12 = arith.constant 0 : index
    %c0_13 = arith.constant 0 : index
    %c0_14 = arith.constant 0 : index
    %16 = vector.load %arg5[%c0_12, %c0_13, %c0_14] : memref<1x32x1xf32, #tpu.memory_space<vmem>>, vector<1x32x1xf32>
    %17 = vector.shape_cast %16 : vector<1x32x1xf32> to vector<32x1xf32>
    %18 = vector.shape_cast %15 : vector<32x1xf32> to vector<1x32x1xf32>
    tpu.vector_store %arg5[%c0_12, %c0_13, %c0_14], %18 {strides = array<i32>} : memref<1x32x1xf32, #tpu.memory_space<vmem>>, vector<1x32x1xf32>,
    return
  }
  func.func @transform_0(%arg0: i32) -> (i32, i32, i32) {
    %c0_i32 = arith.constant 0 : i32
    %c0_i32_0 = arith.constant 0 : i32
    %c0_i32_1 = arith.constant 0 : i32
    return %arg0, %c0_i32, %c0_i32_0 : i32, i32, i32
  }
  func.func @transform_1(%arg0: i32) -> (i32, i32) {
    %c0_i32 = arith.constant 0 : i32
    %c0_i32_0 = arith.constant 0 : i32
    %c0_i32_1 = arith.constant 0 : i32
    return %c0_i32, %c0_i32_0 : i32, i32
  }
  func.func @transform_2(%arg0: i32) -> (i32, i32, i32) {
    %c0_i32 = arith.constant 0 : i32
    %c0_i32_0 = arith.constant 0 : i32
    %c0_i32_1 = arith.constant 0 : i32
    return %arg0, %c0_i32, %c0_i32_0 : i32, i32, i32
  }
  func.func @transform_3(%arg0: i32) -> (i32, i32, i32) {
    %c0_i32 = arith.constant 0 : i32
    %c0_i32_0 = arith.constant 0 : i32
    %c0_i32_1 = arith.constant 0 : i32
    return %arg0, %c0_i32, %c0_i32_0 : i32, i32, i32
  }
  func.func @transform_4(%arg0: i32) -> (i32, i32, i32) {
    %c0_i32 = arith.constant 0 : i32
    %c0_i32_0 = arith.constant 0 : i32
    %c0_i32_1 = arith.constant 0 : i32
    return %arg0, %c0_i32, %c0_i32_0 : i32, i32, i32
  }
}

module attributes {stable_mosaic.version = 11 : i64} {
  func.func @_bn_cbam_kernel(%arg0: i32, %arg1: memref<1x32x256xbf16, #tpu.memory_space<vmem>>, %arg2: memref<32x1xf32, #tpu.memory_space<vmem>>, %arg3: memref<32x1xf32, #tpu.memory_space<vmem>>, %arg4: memref<2x32xf32, #tpu.memory_space<vmem>>, %arg5: memref<32x2xf32, #tpu.memory_space<vmem>>, %arg6: memref<256x256xbf16, #tpu.memory_space<vmem>>, %arg7: memref<256x256xbf16, #tpu.memory_space<vmem>>, %arg8: memref<1x32x256xf32, #tpu.memory_space<vmem>>) attributes {dimension_semantics = [#tpu.dimension_semantics<parallel>], iteration_bounds = array<i64: 2>, scalar_prefetch = 0 : i64, scratch_operands = 0 : i64, tpu.core_type = #tpu.core_type<tc>, window_params = [{transform_indices = @transform_0, window_bounds = array<i64: 1, 32, 256>}, {pipeline_mode = #tpu.pipeline_mode<synchronous>, transform_indices = @transform_1, window_bounds = array<i64: 32, 1>}, {pipeline_mode = #tpu.pipeline_mode<synchronous>, transform_indices = @transform_2, window_bounds = array<i64: 32, 1>}, {pipeline_mode = #tpu.pipeline_mode<synchronous>, transform_indices = @transform_3, window_bounds = array<i64: 2, 32>}, {pipeline_mode = #tpu.pipeline_mode<synchronous>, transform_indices = @transform_4, window_bounds = array<i64: 32, 2>}, {pipeline_mode = #tpu.pipeline_mode<synchronous>, transform_indices = @transform_5, window_bounds = array<i64: 256, 256>}, {pipeline_mode = #tpu.pipeline_mode<synchronous>, transform_indices = @transform_6, window_bounds = array<i64: 256, 256>}, {transform_indices = @transform_7, window_bounds = array<i64: 1, 32, 256>}]} {
    %c0 = arith.constant 0 : index
    %c0_0 = arith.constant 0 : index
    %c0_1 = arith.constant 0 : index
    %0 = vector.load %arg1[%c0, %c0_0, %c0_1] : memref<1x32x256xbf16, #tpu.memory_space<vmem>>, vector<1x32x256xbf16>
    %1 = vector.shape_cast %0 : vector<1x32x256xbf16> to vector<32x256xbf16>
    %2 = arith.extf %1 : vector<32x256xbf16> to vector<32x256xf32>
    %c0_2 = arith.constant 0 : index
    %c0_3 = arith.constant 0 : index
    %3 = vector.load %arg2[%c0_2, %c0_3] : memref<32x1xf32, #tpu.memory_space<vmem>>, vector<32x1xf32>
    %4 = vector.broadcast %3 : vector<32x1xf32> to vector<32x256xf32>
    %5 = arith.mulf %2, %4 : vector<32x256xf32>
    %c0_4 = arith.constant 0 : index
    %c0_5 = arith.constant 0 : index
    %6 = vector.load %arg3[%c0_4, %c0_5] : memref<32x1xf32, #tpu.memory_space<vmem>>, vector<32x1xf32>
    %7 = vector.broadcast %6 : vector<32x1xf32> to vector<32x256xf32>
    %8 = arith.addf %5, %7 : vector<32x256xf32>
    %cst = arith.constant 0.000000e+00 : f32
    %9 = vector.broadcast %cst : f32 to vector<32x256xf32>
    %10 = arith.maximumf %8, %9 : vector<32x256xf32>
    %cst_6 = arith.constant dense<0.000000e+00> : vector<32xf32>
    %11 = vector.multi_reduction <add>, %10, %cst_6 [1] : vector<32x256xf32> to vector<32xf32>
    %12 = vector.shape_cast %11 : vector<32xf32> to vector<32x1xf32>
    %cst_7 = arith.constant 2.560000e+02 : f32
    %13 = vector.broadcast %cst_7 : f32 to vector<32x1xf32>
    %14 = arith.divf %12, %13 : vector<32x1xf32>
    %cst_8 = arith.constant dense<0xFF800000> : vector<32xf32>
    %15 = vector.multi_reduction <maximumf>, %10, %cst_8 [1] : vector<32x256xf32> to vector<32xf32>
    %16 = vector.shape_cast %15 : vector<32xf32> to vector<32x1xf32>
    %c0_9 = arith.constant 0 : index
    %c0_10 = arith.constant 0 : index
    %17 = vector.load %arg4[%c0_9, %c0_10] : memref<2x32xf32, #tpu.memory_space<vmem>>, vector<2x32xf32>
    %c0_11 = arith.constant 0 : index
    %c0_12 = arith.constant 0 : index
    %18 = vector.load %arg5[%c0_11, %c0_12] : memref<32x2xf32, #tpu.memory_space<vmem>>, vector<32x2xf32>
    %cst_13 = arith.constant dense<0.000000e+00> : vector<2x1xf32>
    %19 = tpu.matmul %17, %14, %cst_13 {dimension_numbers = #tpu.dot_dimension_numbers<[1], [0], [0], [1], [0, 0, 1, 1], [], []>} : vector<2x32xf32>, vector<32x1xf32>, vector<2x1xf32> -> vector<2x1xf32>
    %cst_14 = arith.constant 0.000000e+00 : f32
    %20 = vector.broadcast %cst_14 : f32 to vector<2x1xf32>
    %21 = arith.maximumf %19, %20 : vector<2x1xf32>
    %cst_15 = arith.constant dense<0.000000e+00> : vector<32x1xf32>
    %22 = tpu.matmul %18, %21, %cst_15 {dimension_numbers = #tpu.dot_dimension_numbers<[1], [0], [0], [1], [0, 0, 1, 1], [], []>} : vector<32x2xf32>, vector<2x1xf32>, vector<32x1xf32> -> vector<32x1xf32>
    %cst_16 = arith.constant dense<0.000000e+00> : vector<2x1xf32>
    %23 = tpu.matmul %17, %16, %cst_16 {dimension_numbers = #tpu.dot_dimension_numbers<[1], [0], [0], [1], [0, 0, 1, 1], [], []>} : vector<2x32xf32>, vector<32x1xf32>, vector<2x1xf32> -> vector<2x1xf32>
    %cst_17 = arith.constant 0.000000e+00 : f32
    %24 = vector.broadcast %cst_17 : f32 to vector<2x1xf32>
    %25 = arith.maximumf %23, %24 : vector<2x1xf32>
    %cst_18 = arith.constant dense<0.000000e+00> : vector<32x1xf32>
    %26 = tpu.matmul %18, %25, %cst_18 {dimension_numbers = #tpu.dot_dimension_numbers<[1], [0], [0], [1], [0, 0, 1, 1], [], []>} : vector<32x2xf32>, vector<2x1xf32>, vector<32x1xf32> -> vector<32x1xf32>
    %27 = arith.addf %22, %26 : vector<32x1xf32>
    %cst_19 = arith.constant 0.000000e+00 : f32
    %28 = vector.broadcast %cst_19 : f32 to vector<32x1xf32>
    %29 = arith.subf %28, %27 : vector<32x1xf32>
    %30 = math.exp %29 : vector<32x1xf32>
    %cst_20 = arith.constant 1.000000e+00 : f32
    %31 = vector.broadcast %cst_20 : f32 to vector<32x1xf32>
    %32 = arith.addf %31, %30 : vector<32x1xf32>
    %33 = tpu.reciprocal %32 {approx = true} : vector<32x1xf32> -> vector<32x1xf32>
    %34 = vector.broadcast %33 : vector<32x1xf32> to vector<32x256xf32>
    %35 = arith.mulf %10, %34 : vector<32x256xf32>
    %cst_21 = arith.constant dense<0.000000e+00> : vector<256xf32>
    %36 = vector.multi_reduction <add>, %35, %cst_21 [0] : vector<32x256xf32> to vector<256xf32>
    %37 = vector.shape_cast %36 : vector<256xf32> to vector<1x256xf32>
    %cst_22 = arith.constant 3.200000e+01 : f32
    %38 = vector.broadcast %cst_22 : f32 to vector<1x256xf32>
    %39 = arith.divf %37, %38 : vector<1x256xf32>
    %40 = arith.truncf %39 : vector<1x256xf32> to vector<1x256xbf16>
    %cst_23 = arith.constant dense<0xFF800000> : vector<256xf32>
    %41 = vector.multi_reduction <maximumf>, %35, %cst_23 [0] : vector<32x256xf32> to vector<256xf32>
    %42 = vector.shape_cast %41 : vector<256xf32> to vector<1x256xf32>
    %43 = arith.truncf %42 : vector<1x256xf32> to vector<1x256xbf16>
    %c0_24 = arith.constant 0 : index
    %c0_25 = arith.constant 0 : index
    %44 = vector.load %arg6[%c0_24, %c0_25] : memref<256x256xbf16, #tpu.memory_space<vmem>>, vector<256x256xbf16>
    %cst_26 = arith.constant dense<0.000000e+00> : vector<1x256xf32>
    %45 = tpu.matmul %40, %44, %cst_26 {dimension_numbers = #tpu.dot_dimension_numbers<[1], [0], [0], [1], [0, 0, 1, 1], [], []>} : vector<1x256xbf16>, vector<256x256xbf16>, vector<1x256xf32> -> vector<1x256xf32>
    %c0_27 = arith.constant 0 : index
    %c0_28 = arith.constant 0 : index
    %46 = vector.load %arg7[%c0_27, %c0_28] : memref<256x256xbf16, #tpu.memory_space<vmem>>, vector<256x256xbf16>
    %cst_29 = arith.constant dense<0.000000e+00> : vector<1x256xf32>
    %47 = tpu.matmul %43, %46, %cst_29 {dimension_numbers = #tpu.dot_dimension_numbers<[1], [0], [0], [1], [0, 0, 1, 1], [], []>} : vector<1x256xbf16>, vector<256x256xbf16>, vector<1x256xf32> -> vector<1x256xf32>
    %48 = arith.addf %45, %47 : vector<1x256xf32>
    %cst_30 = arith.constant 0.000000e+00 : f32
    %49 = vector.broadcast %cst_30 : f32 to vector<1x256xf32>
    %50 = arith.subf %49, %48 : vector<1x256xf32>
    %51 = math.exp %50 : vector<1x256xf32>
    %cst_31 = arith.constant 1.000000e+00 : f32
    %52 = vector.broadcast %cst_31 : f32 to vector<1x256xf32>
    %53 = arith.addf %52, %51 : vector<1x256xf32>
    %54 = tpu.reciprocal %53 {approx = true} : vector<1x256xf32> -> vector<1x256xf32>
    %55 = vector.broadcast %54 : vector<1x256xf32> to vector<32x256xf32>
    %56 = arith.mulf %35, %55 : vector<32x256xf32>
    %c0_32 = arith.constant 0 : index
    %c0_33 = arith.constant 0 : index
    %c0_34 = arith.constant 0 : index
    %57 = vector.load %arg8[%c0_32, %c0_33, %c0_34] : memref<1x32x256xf32, #tpu.memory_space<vmem>>, vector<1x32x256xf32>
    %58 = vector.shape_cast %57 : vector<1x32x256xf32> to vector<32x256xf32>
    %59 = vector.shape_cast %56 : vector<32x256xf32> to vector<1x32x256xf32>
    tpu.vector_store %arg8[%c0_32, %c0_33, %c0_34], %59 {strides = array<i32>} : memref<1x32x256xf32, #tpu.memory_space<vmem>>, vector<1x32x256xf32>,
    return
  }
  func.func @transform_0(%arg0: i32) -> (i32, i32, i32) {
    %c0_i32 = arith.constant 0 : i32
    %c0_i32_0 = arith.constant 0 : i32
    %c0_i32_1 = arith.constant 0 : i32
    return %arg0, %c0_i32, %c0_i32_0 : i32, i32, i32
  }
  func.func @transform_1(%arg0: i32) -> (i32, i32) {
    %c0_i32 = arith.constant 0 : i32
    %c0_i32_0 = arith.constant 0 : i32
    %c0_i32_1 = arith.constant 0 : i32
    return %c0_i32, %c0_i32_0 : i32, i32
  }
  func.func @transform_2(%arg0: i32) -> (i32, i32) {
    %c0_i32 = arith.constant 0 : i32
    %c0_i32_0 = arith.constant 0 : i32
    %c0_i32_1 = arith.constant 0 : i32
    return %c0_i32, %c0_i32_0 : i32, i32
  }
  func.func @transform_3(%arg0: i32) -> (i32, i32) {
    %c0_i32 = arith.constant 0 : i32
    %c0_i32_0 = arith.constant 0 : i32
    %c0_i32_1 = arith.constant 0 : i32
    return %c0_i32, %c0_i32_0 : i32, i32
  }
  func.func @transform_4(%arg0: i32) -> (i32, i32) {
    %c0_i32 = arith.constant 0 : i32
    %c0_i32_0 = arith.constant 0 : i32
    %c0_i32_1 = arith.constant 0 : i32
    return %c0_i32, %c0_i32_0 : i32, i32
  }
  func.func @transform_5(%arg0: i32) -> (i32, i32) {
    %c0_i32 = arith.constant 0 : i32
    %c0_i32_0 = arith.constant 0 : i32
    %c0_i32_1 = arith.constant 0 : i32
    return %c0_i32, %c0_i32_0 : i32, i32
  }
  func.func @transform_6(%arg0: i32) -> (i32, i32) {
    %c0_i32 = arith.constant 0 : i32
    %c0_i32_0 = arith.constant 0 : i32
    %c0_i32_1 = arith.constant 0 : i32
    return %c0_i32, %c0_i32_0 : i32, i32
  }
  func.func @transform_7(%arg0: i32) -> (i32, i32, i32) {
    %c0_i32 = arith.constant 0 : i32
    %c0_i32_0 = arith.constant 0 : i32
    %c0_i32_1 = arith.constant 0 : i32
    return %arg0, %c0_i32, %c0_i32_0 : i32, i32, i32
  }
}

</mosaic_0001>

<llo_original>
// kernel: multiscale_feature_extractor.2
$region0: #{multiscale_feature_extractor.2}
  #allocation0 [shape = 'u32[]', space=smem, size = 0x4, offset = 0x4, fixed_abs, tag = 'smem constant byte address 0x4 - core index']
  #allocation1 [shape = 'u32[144,128]{1,0:T(1,128)}', space=vmem, size = 0x12000, scoped, tag = 'internal scratch']
  %s0 = inlined_call_operand.vmem [shape: bf16[2,256,256], index: 0, kind: input, shape index: {}]
  %s1 = inlined_call_operand.vmem [shape: bf16[32,256], index: 1, kind: input, shape index: {}]
  %s2 = inlined_call_operand.vmem [shape: bf16[2,32,256], index: 2, kind: output, shape index: {0}]
  %s3 = inlined_call_operand.vmem [shape: f32[2,32,1], index: 3, kind: output, shape index: {1}]
  %s4 = inlined_call_operand.vmem [shape: f32[2,32,1], index: 4, kind: output, shape index: {2}]
  %5 = xla_tuple %s2, %s3, %s4
  %s6 = sld [smem:[#allocation0]]
  $region57: #{multiscale_feature_extractor.2} parent=0
    _
  %s8 = ssub.s32 1, %s6
  %s9 = scalar_select 0, %s8, %s6
  loop: start=0, step=1, limit=4
  $region2: #{multiscale_feature_extractor.2} parent=0 // loop_pre_header
    _
  $region3: #{multiscale_feature_extractor.2} parent=0 // loop_header
    %s11 = sphi 0, %s15
    %p12 = scmp.ge.s32.totalorder %s11, 4
    %s21 = sphi 0, %s23
    %s24 = sphi 0, %s21
    %s25 = sphi 0, %s24
    %s41 = sphi 0, %s25
    %s45 = sphi 0, %s45
    %s47 = sphi 0, %s45
    %s48 = sphi 0, %s47
    %s62 = sphi 0, %s48
    %s68 = sphi 0, %s70
    %s71 = sphi 0, %s68
    %s72 = sphi 0, %s71
    %s88 = sphi 0, %s72
    %s94 = sphi 0, %s96
    %s97 = sphi 0, %s94
    %s98 = sphi 0, %s97
    %s114 = sphi 0, %s98
    %s120 = sphi 0, %s122
    %s123 = sphi 0, %s120
    %s124 = sphi 0, %s123
    %s140 = sphi 0, %s124
  $region4: #{multiscale_feature_extractor.2} parent=0 // loop_header_branch
    %14 = sbr.rel (%p12) target = $region8
  $region5: #{multiscale_feature_extractor.2} parent=0 // loop_body
    %s16 = ssub.s32 %s11, 1
    %s17 = ssub.s32 %s11, 2
    %s18 = sadd.s32 %s11, 1
    %s19 = ssub.s32 %s11, %s18
    %p20 = scmp.eq.s32.totalorder %s19, 0
    %s22 = sadd.s32 %s21, 1
    %s23 = scalar_select %p20, %s21, %s22
    %p26 = pneg %p20
    %p27 = scmp.eq.s32.totalorder %s11, 1
    %p28 = por %p26, %p27
    %p29 = scmp.ne.s32.totalorder %s21, %s24
    %p30 = scmp.eq.s32.totalorder %s11, 0
    %p31 = por %p29, %p30
    %p32 = scmp.ne.s32.totalorder %s21, %s24
    %p33 = scmp.eq.s32.totalorder %s16, 1
    %p34 = por %p32, %p33
    %p35 = scmp.ne.s32.totalorder %s24, %s25
    %p36 = scmp.eq.s32.totalorder %s16, 0
    %p37 = por %p35, %p36
    %p38 = scmp.ne.s32.totalorder %s24, %s25
    %p39 = scmp.eq.s32.totalorder %s17, 1
    %p40 = por %p38, %p39
    %p42 = scmp.ne.s32.totalorder %s25, %s41
    %p43 = scmp.eq.s32.totalorder %s17, 0
    %p44 = por %p42, %p43
    %s46 = sadd.s32 %s45, 1
    %p49 = scmp.eq.s32.totalorder %s11, 1
    %p50 = scmp.ne.s32.totalorder %s45, %s47
    %p51 = scmp.eq.s32.totalorder %s11, 0
    %p52 = por %p50, %p51
    %p53 = scmp.ne.s32.totalorder %s45, %s47
    %p54 = scmp.eq.s32.totalorder %s16, 1
    %p55 = por %p53, %p54
    %p56 = scmp.ne.s32.totalorder %s47, %s48
    %p57 = scmp.eq.s32.totalorder %s16, 0
    %p58 = por %p56, %p57
    %p59 = scmp.ne.s32.totalorder %s47, %s48
    %p60 = scmp.eq.s32.totalorder %s17, 1
    %p61 = por %p59, %p60
    %p63 = scmp.ne.s32.totalorder %s48, %s62
    %p64 = scmp.eq.s32.totalorder %s17, 0
    %p65 = por %p63, %p64
    %s66 = ssub.s32 %s11, %s18
    %p67 = scmp.eq.s32.totalorder %s66, 0
    %s69 = sadd.s32 %s68, 1
    %s70 = scalar_select %p67, %s68, %s69
    %p73 = pneg %p67
    %p74 = scmp.eq.s32.totalorder %s11, 1
    %p75 = por %p73, %p74
    %p76 = scmp.ne.s32.totalorder %s68, %s71
    %p77 = scmp.eq.s32.totalorder %s11, 0
    %p78 = por %p76, %p77
    %p79 = scmp.ne.s32.totalorder %s68, %s71
    %p80 = scmp.eq.s32.totalorder %s16, 1
    %p81 = por %p79, %p80
    %p82 = scmp.ne.s32.totalorder %s71, %s72
    %p83 = scmp.eq.s32.totalorder %s16, 0
    %p84 = por %p82, %p83
    %p85 = scmp.ne.s32.totalorder %s71, %s72
    %p86 = scmp.eq.s32.totalorder %s17, 1
    %p87 = por %p85, %p86
    %p89 = scmp.ne.s32.totalorder %s72, %s88
    %p90 = scmp.eq.s32.totalorder %s17, 0
    %p91 = por %p89, %p90
    %s92 = ssub.s32 %s11, %s18
    %p93 = scmp.eq.s32.totalorder %s92, 0
    %s95 = sadd.s32 %s94, 1
    %s96 = scalar_select %p93, %s94, %s95
    %p99 = pneg %p93
    %p100 = scmp.eq.s32.totalorder %s11, 1
    %p101 = por %p99, %p100
    %p102 = scmp.ne.s32.totalorder %s94, %s97
    %p103 = scmp.eq.s32.totalorder %s11, 0
    %p104 = por %p102, %p103
    %p105 = scmp.ne.s32.totalorder %s94, %s97
    %p106 = scmp.eq.s32.totalorder %s16, 1
    %p107 = por %p105, %p106
    %p108 = scmp.ne.s32.totalorder %s97, %s98
    %p109 = scmp.eq.s32.totalorder %s16, 0
    %p110 = por %p108, %p109
    %p111 = scmp.ne.s32.totalorder %s97, %s98
    %p112 = scmp.eq.s32.totalorder %s17, 1
    %p113 = por %p111, %p112
    %p115 = scmp.ne.s32.totalorder %s98, %s114
    %p116 = scmp.eq.s32.totalorder %s17, 0
    %p117 = por %p115, %p116
    %s118 = ssub.s32 %s11, %s18
    %p119 = scmp.eq.s32.totalorder %s118, 0
    %s121 = sadd.s32 %s120, 1
    %s122 = scalar_select %p119, %s120, %s121
    %p125 = pneg %p119
    %p126 = scmp.eq.s32.totalorder %s11, 1
    %p127 = por %p125, %p126
    %p128 = scmp.ne.s32.totalorder %s120, %s123
    %p129 = scmp.eq.s32.totalorder %s11, 0
    %p130 = por %p128, %p129
    %p131 = scmp.ne.s32.totalorder %s120, %s123
    %p132 = scmp.eq.s32.totalorder %s16, 1
    %p133 = por %p131, %p132
    %p134 = scmp.ne.s32.totalorder %s123, %s124
    %p135 = scmp.eq.s32.totalorder %s16, 0
    %p136 = por %p134, %p135
    %p137 = scmp.ne.s32.totalorder %s123, %s124
    %p138 = scmp.eq.s32.totalorder %s17, 1
    %p139 = por %p137, %p138
    %p141 = scmp.ne.s32.totalorder %s124, %s140
    %p142 = scmp.eq.s32.totalorder %s17, 0
    %p143 = por %p141, %p142
    %p144 = scmp.le.s32.totalorder 1, %s11
    %p145 = scmp.lt.s32.totalorder %s11, 3
    %p146 = pnand %p144, %p145
    %p147 = pneg %p146
    // Predicated region
    $region9: #{multiscale_feature_extractor.2} parent=5 // pred_check
      _
    $region10: #{multiscale_feature_extractor.2} parent=5 // pred_check_branch
      %149 = sbr.rel (%p146) target = $region12
    $region11: #{multiscale_feature_extractor.2} parent=5 // pred_region
      %s150 = ssub.s32 %s11, 1
      // Predicated region
      $region13: #{multiscale_feature_extractor.2} parent=11 // pred_check
        %p151 = pneg %p58
      $region14: #{multiscale_feature_extractor.2} parent=11 // pred_check_branch
        %153 = sbr.rel (%p151) target = $region16
      $region15: #{multiscale_feature_extractor.2} parent=11 // pred_region
        _
      $region16: #{multiscale_feature_extractor.2} parent=11 // pred_fallthru
        _
    $region12: #{multiscale_feature_extractor.2} parent=5 // pred_fallthru
      _
    %p154 = scmp.lt.s32.totalorder %s11, 2
    // Predicated region
    $region17: #{multiscale_feature_extractor.2} parent=5 // pred_check
      %p155 = pneg %p154
    $region18: #{multiscale_feature_extractor.2} parent=5 // pred_check_branch
      %157 = sbr.rel (%p155) target = $region20
    $region19: #{multiscale_feature_extractor.2} parent=5 // pred_region
      // Predicated region
      $region21: #{multiscale_feature_extractor.2} parent=19 // pred_check
        %p158 = pneg %p31
      $region22: #{multiscale_feature_extractor.2} parent=19 // pred_check_branch
        %160 = sbr.rel (%p158) target = $region24
      $region23: #{multiscale_feature_extractor.2} parent=19 // pred_region
        %p161 = scmp.lt.s32.totalorder %s11, 1
        %s162 = scalar_select %p161, %s11, 1
        %s163 = smul.addr %s162, 64
        %s164 = smul.addr %s163, 4
        %s165 = scalar_lea.vmem %s0, %s164
      $region24: #{multiscale_feature_extractor.2} parent=19 // pred_fallthru
        _
    $region20: #{multiscale_feature_extractor.2} parent=5 // pred_fallthru
      _
    %p166 = scmp.le.s32.totalorder 1, %s11
    %p167 = scmp.lt.s32.totalorder %s11, 3
    %p168 = pnand %p166, %p167
    %p169 = pneg %p168
    // Predicated region
    $region25: #{multiscale_feature_extractor.2} parent=5 // pred_check
      _
    $region26: #{multiscale_feature_extractor.2} parent=5 // pred_check_branch
      %171 = sbr.rel (%p168) target = $region28
    $region27: #{multiscale_feature_extractor.2} parent=5 // pred_region
      %s172 = ssub.s32 %s11, 1
      %p173 = scmp.lt.s32.totalorder %s16, 1
      %s174 = scalar_select %p173, %s16, 1
      %s175 = smul.addr %s174, 64
      %s176 = smul.addr %s175, 4
      %s177 = scalar_lea.vmem %s0, %s176
      %p178 = pneg %p37
      %p179 = pneg %p34
      %p180 = pneg %p58
      %p181 = pneg %p55
      %p182 = pneg %p84
      %p183 = pneg %p81
      %p184 = scmp.lt.s32.totalorder %s16, 1
      %s185 = scalar_select %p184, %s16, 1
      %s186 = smul.addr %s185, 8
      %s187 = smul.addr %s186, 4
      %s188 = scalar_lea.vmem %s2, %s187
      %p189 = pneg %p110
      %p190 = pneg %p107
      %p191 = scmp.lt.s32.totalorder %s16, 1
      %s192 = scalar_select %p191, %s16, 1
      %s193 = smul.addr %s192, 4
      %s194 = smul.addr %s193, 8
      %s195 = scalar_lea.vmem %s3, %s194
      %p196 = pneg %p136
      %p197 = pneg %p133
      %p198 = scmp.lt.s32.totalorder %s16, 1
      %s199 = scalar_select %p198, %s16, 1
      %s200 = smul.addr %s199, 4
      %s201 = smul.addr %s200, 8
      %s202 = scalar_lea.vmem %s4, %s201
      %p203 = scmp.lt.s32.totalorder %s16, 1
      %s204 = scalar_select %p203, %s16, 1
      %s205 = smul.addr %s204, 64
      %s206 = smul.addr %s205, 4
      %s207 = scalar_lea.vmem %s0, %s206
      %p208 = scmp.lt.s32.totalorder %s16, 1
      %s209 = scalar_select %p208, %s16, 1
      %s210 = smul.addr %s209, 8
      %s211 = smul.addr %s210, 4
      %s212 = scalar_lea.vmem %s2, %s211
      %p213 = scmp.lt.s32.totalorder %s16, 1
      %s214 = scalar_select %p213, %s16, 1
      %s215 = smul.addr %s214, 4
      %s216 = smul.addr %s215, 8
      %s217 = scalar_lea.vmem %s3, %s216
      %p218 = scmp.lt.s32.totalorder %s16, 1
      %s219 = scalar_select %p218, %s16, 1
      %s220 = smul.addr %s219, 4
      %s221 = smul.addr %s220, 8
      %s222 = scalar_lea.vmem %s4, %s221
      %v223 = vld [vmem:[%s1] sm:$0xff]
      %v224 = vld [vmem:[%s1 + $0x8] sm:$0xff]
      %v225 = vld [vmem:[%s1 + $0x10] sm:$0xff]
      %v226 = vld [vmem:[%s1 + $0x18] sm:$0xff]
      %v227 = vld [vmem:[%s207] sm:$0xff]
      %v228 = vld [vmem:[%s207 + $0x8] sm:$0xff]
      %v229 = vld [vmem:[%s207 + $0x10] sm:$0xff]
      %v230 = vld [vmem:[%s207 + $0x18] sm:$0xff]
      %v231 = vld [vmem:[%s207 + $0x20] sm:$0xff]
      %v232 = vld [vmem:[%s207 + $0x28] sm:$0xff]
      %v233 = vld [vmem:[%s207 + $0x30] sm:$0xff]
      %v234 = vld [vmem:[%s207 + $0x38] sm:$0xff]
      %v235 = vld [vmem:[%s207 + $0x40] sm:$0xff]
      %v236 = vld [vmem:[%s207 + $0x48] sm:$0xff]
      %v237 = vld [vmem:[%s207 + $0x50] sm:$0xff]
      %v238 = vld [vmem:[%s207 + $0x58] sm:$0xff]
      %v239 = vld [vmem:[%s207 + $0x60] sm:$0xff]
      %v240 = vld [vmem:[%s207 + $0x68] sm:$0xff]
      %v241 = vld [vmem:[%s207 + $0x70] sm:$0xff]
      %v242 = vld [vmem:[%s207 + $0x78] sm:$0xff]
      %v243 = vld [vmem:[%s207 + $0x80] sm:$0xff]
      %v244 = vld [vmem:[%s207 + $0x88] sm:$0xff]
      %v245 = vld [vmem:[%s207 + $0x90] sm:$0xff]
      %v246 = vld [vmem:[%s207 + $0x98] sm:$0xff]
      %v247 = vld [vmem:[%s207 + $0xa0] sm:$0xff]
      %v248 = vld [vmem:[%s207 + $0xa8] sm:$0xff]
      %v249 = vld [vmem:[%s207 + $0xb0] sm:$0xff]
      %v250 = vld [vmem:[%s207 + $0xb8] sm:$0xff]
      %v251 = vld [vmem:[%s207 + $0xc0] sm:$0xff]
      %v252 = vld [vmem:[%s207 + $0xc8] sm:$0xff]
      %v253 = vld [vmem:[%s207 + $0xd0] sm:$0xff]
      %v254 = vld [vmem:[%s207 + $0xd8] sm:$0xff]
      %v255 = vld [vmem:[%s207 + $0xe0] sm:$0xff]
      %v256 = vld [vmem:[%s207 + $0xe8] sm:$0xff]
      %v257 = vld [vmem:[%s207 + $0xf0] sm:$0xff]
      %v258 = vld [vmem:[%s207 + $0xf8] sm:$0xff]
      %v263 = vunpack.c.l.b16 %v223
      %v264 = vunpack.c.h.b16 %v223
      %v265 = vunpack.c.l.b16 %v224
      %v266 = vunpack.c.h.b16 %v224
      %v267 = vunpack.c.l.b16 %v225
      %v268 = vunpack.c.h.b16 %v225
      %v269 = vunpack.c.l.b16 %v226
      %v270 = vunpack.c.h.b16 %v226
      %v271 = vpack.c.b16 %v265, %v263
      %v272 = vpack.c.b16 %v266, %v264
      %v273 = vpack.c.b16 %v269, %v267
      %v274 = vpack.c.b16 %v270, %v268
      %v311 = vunpack.c.l.b16 %v227
      %v312 = vunpack.c.h.b16 %v227
      %v313 = vunpack.c.l.b16 %v228
      %v314 = vunpack.c.h.b16 %v228
      %v315 = vunpack.c.l.b16 %v229
      %v316 = vunpack.c.h.b16 %v229
      %v317 = vunpack.c.l.b16 %v230
      %v318 = vunpack.c.h.b16 %v230
      %v319 = vunpack.c.l.b16 %v231
      %v320 = vunpack.c.h.b16 %v231
      %v321 = vunpack.c.l.b16 %v232
      %v322 = vunpack.c.h.b16 %v232
      %v323 = vunpack.c.l.b16 %v233
      %v324 = vunpack.c.h.b16 %v233
      %v325 = vunpack.c.l.b16 %v234
      %v326 = vunpack.c.h.b16 %v234
      %v327 = vunpack.c.l.b16 %v235
      %v328 = vunpack.c.h.b16 %v235
      %v329 = vunpack.c.l.b16 %v236
      %v330 = vunpack.c.h.b16 %v236
      %v331 = vunpack.c.l.b16 %v237
      %v332 = vunpack.c.h.b16 %v237
      %v333 = vunpack.c.l.b16 %v238
      %v334 = vunpack.c.h.b16 %v238
      %v335 = vunpack.c.l.b16 %v239
      %v336 = vunpack.c.h.b16 %v239
      %v337 = vunpack.c.l.b16 %v240
      %v338 = vunpack.c.h.b16 %v240
      %v339 = vunpack.c.l.b16 %v241
      %v340 = vunpack.c.h.b16 %v241
      %v341 = vunpack.c.l.b16 %v242
      %v342 = vunpack.c.h.b16 %v242
      %v343 = vunpack.c.l.b16 %v243
      %v344 = vunpack.c.h.b16 %v243
      %v345 = vunpack.c.l.b16 %v244
      %v346 = vunpack.c.h.b16 %v244
      %v347 = vunpack.c.l.b16 %v245
      %v348 = vunpack.c.h.b16 %v245
      %v349 = vunpack.c.l.b16 %v246
      %v350 = vunpack.c.h.b16 %v246
      %v351 = vunpack.c.l.b16 %v247
      %v352 = vunpack.c.h.b16 %v247
      %v353 = vunpack.c.l.b16 %v248
      %v354 = vunpack.c.h.b16 %v248
      %v355 = vunpack.c.l.b16 %v249
      %v356 = vunpack.c.h.b16 %v249
      %v357 = vunpack.c.l.b16 %v250
      %v358 = vunpack.c.h.b16 %v250
      %v359 = vunpack.c.l.b16 %v251
      %v360 = vunpack.c.h.b16 %v251
      %v361 = vunpack.c.l.b16 %v252
      %v362 = vunpack.c.h.b16 %v252
      %v363 = vunpack.c.l.b16 %v253
      %v364 = vunpack.c.h.b16 %v253
      %v365 = vunpack.c.l.b16 %v254
      %v366 = vunpack.c.h.b16 %v254
      %v367 = vunpack.c.l.b16 %v255
      %v368 = vunpack.c.h.b16 %v255
      %v369 = vunpack.c.l.b16 %v256
      %v370 = vunpack.c.h.b16 %v256
      %v371 = vunpack.c.l.b16 %v257
      %v372 = vunpack.c.h.b16 %v257
      %v373 = vunpack.c.l.b16 %v258
      %v374 = vunpack.c.h.b16 %v258
      %v375 = vpack.c.b16 %v313, %v311
      %v376 = vpack.c.b16 %v314, %v312
      %v377 = vpack.c.b16 %v317, %v315
      %v378 = vpack.c.b16 %v318, %v316
      %v379 = vpack.c.b16 %v321, %v319
      %v380 = vpack.c.b16 %v322, %v320
      %v381 = vpack.c.b16 %v325, %v323
      %v382 = vpack.c.b16 %v326, %v324
      %v383 = vpack.c.b16 %v329, %v327
      %v384 = vpack.c.b16 %v330, %v328
      %v385 = vpack.c.b16 %v333, %v331
      %v386 = vpack.c.b16 %v334, %v332
      %v387 = vpack.c.b16 %v337, %v335
      %v388 = vpack.c.b16 %v338, %v336
      %v389 = vpack.c.b16 %v341, %v339
      %v390 = vpack.c.b16 %v342, %v340
      %v391 = vpack.c.b16 %v345, %v343
      %v392 = vpack.c.b16 %v346, %v344
      %v393 = vpack.c.b16 %v349, %v347
      %v394 = vpack.c.b16 %v350, %v348
      %v395 = vpack.c.b16 %v353, %v351
      %v396 = vpack.c.b16 %v354, %v352
      %v397 = vpack.c.b16 %v357, %v355
      %v398 = vpack.c.b16 %v358, %v356
      %v399 = vpack.c.b16 %v361, %v359
      %v400 = vpack.c.b16 %v362, %v360
      %v401 = vpack.c.b16 %v365, %v363
      %v402 = vpack.c.b16 %v366, %v364
      %v403 = vpack.c.b16 %v369, %v367
      %v404 = vpack.c.b16 %v370, %v368
      %v405 = vpack.c.b16 %v373, %v371
      %v406 = vpack.c.b16 %v374, %v372
      %439 = vmatprep.subr.bf16.mxu0 %v376
      %440 = vmatpush1.bf16.msra.mxu0 %v375
      %441 = vmatprep.subr.bf16.mxu0 %v378
      %442 = vmatpush1.bf16.msra.mxu0 %v377
      %443 = vmatprep.subr.bf16.mxu0 %v380
      %444 = vmatpush1.bf16.msra.mxu0 %v379
      %445 = vmatprep.subr.bf16.mxu0 %v382
      %446 = vmatpush1.bf16.msra.mxu0 %v381
      %447 = vmatprep.subr.bf16.mxu0 %v384
      %448 = vmatpush1.bf16.msra.mxu0 %v383
      %449 = vmatprep.subr.bf16.mxu0 %v386
      %450 = vmatpush1.bf16.msra.mxu0 %v385
      %451 = vmatprep.subr.bf16.mxu0 %v388
      %452 = vmatpush1.bf16.msra.mxu0 %v387
      %453 = vmatprep.subr.bf16.mxu0 %v390
      %454 = vmatpush1.bf16.msra.mxu0 %v389
      %455 = vmatprep.subr.bf16.mxu0 %v392
      %456 = vmatpush1.bf16.msra.mxu0 %v391
      %457 = vmatprep.subr.bf16.mxu0 %v394
      %458 = vmatpush1.bf16.msra.mxu0 %v393
      %459 = vmatprep.subr.bf16.mxu0 %v396
      %460 = vmatpush1.bf16.msra.mxu0 %v395
      %461 = vmatprep.subr.bf16.mxu0 %v398
      %462 = vmatpush1.bf16.msra.mxu0 %v397
      %463 = vmatprep.subr.bf16.mxu0 %v400
      %464 = vmatpush1.bf16.msra.mxu0 %v399
      %465 = vmatprep.subr.bf16.mxu0 %v402
      %466 = vmatpush1.bf16.msra.mxu0 %v401
      %467 = vmatprep.subr.bf16.mxu0 %v404
      %468 = vmatpush1.bf16.msra.mxu0 %v403
      %469 = vmatprep.subr.bf16.mxu0 %v406
      %470 = vmatpush1.bf16.msra.mxu0 %v405
      %471 = vmatprep.mubr.bf16.mxu0 %v272
      %472 = vmatmul.mubr.bf16.gmra.mrb[0].mxu0 %v271
      %v473 = vpop.f32.mrb[0].mxu0
      %v474 = vadd.f32 0.0, %v473
      %v475 = vpop.f32.mrb[0].mxu0
      %v476 = vadd.f32 0.0, %v475
      %v477 = vpop.f32.mrb[0].mxu0
      %v478 = vadd.f32 0.0, %v477
      %v479 = vpop.f32.mrb[0].mxu0
      %v480 = vadd.f32 0.0, %v479
      %481 = vmatprep.mubr.bf16.mxu0 %v274
      %482 = vmatmul.mubr.bf16.gmra.mrb[0].mxu0 %v273
      %v483 = vpop.f32.mrb[0].mxu0
      %v484 = vadd.f32 0.0, %v483
      %v485 = vpop.f32.mrb[0].mxu0
      %v486 = vadd.f32 0.0, %v485
      %v487 = vpop.f32.mrb[0].mxu0
      %v488 = vadd.f32 0.0, %v487
      %v489 = vpop.f32.mrb[0].mxu0
      %v490 = vadd.f32 0.0, %v489
      %491 = vdwg.mxu0
      %v492 = vpack.c.bf16 %v478, %v474
      %v493 = vpack.c.bf16 %v480, %v476
      %v494 = vpack.c.bf16 %v488, %v484
      %v495 = vpack.c.bf16 %v490, %v486
      %v500 = vunpack.c.l.b16 %v492
      %v501 = vunpack.c.l.b16 %v493
      %v502 = vunpack.c.h.b16 %v492
      %v503 = vunpack.c.h.b16 %v493
      %v504 = vunpack.c.l.b16 %v494
      %v505 = vunpack.c.l.b16 %v495
      %v506 = vunpack.c.h.b16 %v494
      %v507 = vunpack.c.h.b16 %v495
      %v508 = vpack.c.b16 %v501, %v500
      %v509 = vpack.c.b16 %v503, %v502
      %v510 = vpack.c.b16 %v505, %v504
      %v511 = vpack.c.b16 %v507, %v506
      %516 = vst [vmem:[%s212] sm:$0xff] %v508
      %517 = vst [vmem:[%s212 + $0x8] sm:$0xff] %v509
      %518 = vst [vmem:[%s212 + $0x10] sm:$0xff] %v510
      %519 = vst [vmem:[%s212 + $0x18] sm:$0xff] %v511
      %v520 = vadd.f32 %v474, %v476
      %521 = vadd.xlane.f32.xlu0 %v520
      %v522 = vpop.xlane.xlu0 %521
      %v523 = vadd.f32 %v478, %v480
      %524 = vadd.xlane.f32.xlu0 %v523
      %v525 = vpop.xlane.xlu0 %524
      %v526 = vadd.f32 %v484, %v486
      %527 = vadd.xlane.f32.xlu0 %v526
      %v528 = vpop.xlane.xlu0 %527
      %v529 = vadd.f32 %v488, %v490
      %530 = vadd.xlane.f32.xlu0 %v529
      %v531 = vpop.xlane.xlu0 %530
      %vm532 = vcmask 7168
      %533 = vst.msk [vmem:[%s217] sm:$0xff] %vm532, %v522
      %534 = vst.msk [vmem:[%s217 + $0x8] sm:$0xff] %vm532, %v525
      %535 = vst.msk [vmem:[%s217 + $0x10] sm:$0xff] %vm532, %v528
      %536 = vst.msk [vmem:[%s217 + $0x18] sm:$0xff] %vm532, %v531
      %v537 = vmul.f32 %v474, %v474
      %v538 = vmul.f32 %v476, %v476
      %v539 = vmul.f32 %v478, %v478
      %v540 = vmul.f32 %v480, %v480
      %v541 = vmul.f32 %v484, %v484
      %v542 = vmul.f32 %v486, %v486
      %v543 = vmul.f32 %v488, %v488
      %v544 = vmul.f32 %v490, %v490
      %v545 = vadd.f32 %v537, %v538
      %546 = vadd.xlane.f32.xlu0 %v545
      %v547 = vpop.xlane.xlu0 %546
      %v548 = vadd.f32 %v539, %v540
      %549 = vadd.xlane.f32.xlu0 %v548
      %v550 = vpop.xlane.xlu0 %549
      %v551 = vadd.f32 %v541, %v542
      %552 = vadd.xlane.f32.xlu0 %v551
      %v553 = vpop.xlane.xlu0 %552
      %v554 = vadd.f32 %v543, %v544
      %555 = vadd.xlane.f32.xlu0 %v554
      %v556 = vpop.xlane.xlu0 %555
      %557 = vst.msk [vmem:[%s222] sm:$0xff] %vm532, %v547
      %558 = vst.msk [vmem:[%s222 + $0x8] sm:$0xff] %vm532, %v550
      %559 = vst.msk [vmem:[%s222 + $0x10] sm:$0xff] %vm532, %v553
      %560 = vst.msk [vmem:[%s222 + $0x18] sm:$0xff] %vm532, %v556
      %p561 = scmp.lt.s32.totalorder %s16, 1
      %s562 = scalar_select %p561, %s16, 1
      %s563 = smul.addr %s562, 8
      %s564 = smul.addr %s563, 4
      %s565 = scalar_lea.vmem %s2, %s564
      %p566 = scmp.lt.s32.totalorder %s16, 1
      %s567 = scalar_select %p566, %s16, 1
      %s568 = smul.addr %s567, 4
      %s569 = smul.addr %s568, 8
      %s570 = scalar_lea.vmem %s3, %s569
      %p571 = scmp.lt.s32.totalorder %s16, 1
      %s572 = scalar_select %p571, %s16, 1
      %s573 = smul.addr %s572, 4
      %s574 = smul.addr %s573, 8
      %s575 = scalar_lea.vmem %s4, %s574
      // Predicated region
      $region29: #{multiscale_feature_extractor.2} parent=27 // pred_check
        %p576 = pneg %p81
      $region30: #{multiscale_feature_extractor.2} parent=27 // pred_check_branch
        %578 = sbr.rel (%p576) target = $region32
      $region31: #{multiscale_feature_extractor.2} parent=27 // pred_region
        _
      $region32: #{multiscale_feature_extractor.2} parent=27 // pred_fallthru
        _
      // Predicated region
      $region33: #{multiscale_feature_extractor.2} parent=27 // pred_check
        %p579 = pneg %p107
      $region34: #{multiscale_feature_extractor.2} parent=27 // pred_check_branch
        %581 = sbr.rel (%p579) target = $region36
      $region35: #{multiscale_feature_extractor.2} parent=27 // pred_region
        _
      $region36: #{multiscale_feature_extractor.2} parent=27 // pred_fallthru
        _
      // Predicated region
      $region37: #{multiscale_feature_extractor.2} parent=27 // pred_check
        %p582 = pneg %p133
      $region38: #{multiscale_feature_extractor.2} parent=27 // pred_check_branch
        %584 = sbr.rel (%p582) target = $region40
      $region39: #{multiscale_feature_extractor.2} parent=27 // pred_region
        _
      $region40: #{multiscale_feature_extractor.2} parent=27 // pred_fallthru
        _
    $region28: #{multiscale_feature_extractor.2} parent=5 // pred_fallthru
      _
    %p585 = scmp.le.s32.totalorder 2, %s11
    // Predicated region
    $region41: #{multiscale_feature_extractor.2} parent=5 // pred_check
      %p586 = pneg %p585
    $region42: #{multiscale_feature_extractor.2} parent=5 // pred_check_branch
      %588 = sbr.rel (%p586) target = $region44
    $region43: #{multiscale_feature_extractor.2} parent=5 // pred_region
      %s589 = ssub.s32 %s11, 2
      // Predicated region
      $region45: #{multiscale_feature_extractor.2} parent=43 // pred_check
        %p590 = pneg %p87
      $region46: #{multiscale_feature_extractor.2} parent=43 // pred_check_branch
        %592 = sbr.rel (%p590) target = $region48
      $region47: #{multiscale_feature_extractor.2} parent=43 // pred_region
        %p593 = scmp.lt.s32.totalorder %s17, 1
        %s594 = scalar_select %p593, %s17, 1
        %s595 = smul.addr %s594, 8
        %s596 = smul.addr %s595, 4
        %s597 = scalar_lea.vmem %s2, %s596
      $region48: #{multiscale_feature_extractor.2} parent=43 // pred_fallthru
        _
      // Predicated region
      $region49: #{multiscale_feature_extractor.2} parent=43 // pred_check
        %p598 = pneg %p113
      $region50: #{multiscale_feature_extractor.2} parent=43 // pred_check_branch
        %600 = sbr.rel (%p598) target = $region52
      $region51: #{multiscale_feature_extractor.2} parent=43 // pred_region
        %p601 = scmp.lt.s32.totalorder %s17, 1
        %s602 = scalar_select %p601, %s17, 1
        %s603 = smul.addr %s602, 4
        %s604 = smul.addr %s603, 8
        %s605 = scalar_lea.vmem %s3, %s604
      $region52: #{multiscale_feature_extractor.2} parent=43 // pred_fallthru
        _
      // Predicated region
      $region53: #{multiscale_feature_extractor.2} parent=43 // pred_check
        %p606 = pneg %p139
      $region54: #{multiscale_feature_extractor.2} parent=43 // pred_check_branch
        %608 = sbr.rel (%p606) target = $region56
      $region55: #{multiscale_feature_extractor.2} parent=43 // pred_region
        %p609 = scmp.lt.s32.totalorder %s17, 1
        %s610 = scalar_select %p609, %s17, 1
        %s611 = smul.addr %s610, 4
        %s612 = smul.addr %s611, 8
        %s613 = scalar_lea.vmem %s4, %s612
      $region56: #{multiscale_feature_extractor.2} parent=43 // pred_fallthru
        _
    $region44: #{multiscale_feature_extractor.2} parent=5 // pred_fallthru
      _
  $region6: #{multiscale_feature_extractor.2} parent=0 // loop_footer
    %s15 = sadd.s32 1, %s11
  $region7: #{multiscale_feature_extractor.2} parent=0 // loop_footer_branch
    %10 = sbr.rel target = $region3
  $region8: #{multiscale_feature_extractor.2} parent=0 // loop_exit
    _

// kernel: multiscale_feature_extractor.3
$region0: #{multiscale_feature_extractor.3}
  #allocation0 [shape = 'u32[]', space=smem, size = 0x4, offset = 0x4, fixed_abs, tag = 'smem constant byte address 0x4 - core index']
  #allocation1 [shape = 'u32[144,128]{1,0:T(1,128)}', space=vmem, size = 0x12000, scoped, tag = 'internal scratch']
  %s0 = inlined_call_operand.vmem [shape: bf16[2,32,256], index: 0, kind: input, shape index: {}]
  %s1 = inlined_call_operand.vmem [shape: f32[32,1], index: 1, kind: input, shape index: {}]
  %s2 = inlined_call_operand.vmem [shape: f32[32,1], index: 2, kind: input, shape index: {}]
  %s3 = inlined_call_operand.vmem [shape: f32[2,32], index: 3, kind: input, shape index: {}]
  %s4 = inlined_call_operand.vmem [shape: f32[32,2], index: 4, kind: input, shape index: {}]
  %s5 = inlined_call_operand.vmem [shape: bf16[256,256], index: 5, kind: input, shape index: {}]
  %s6 = inlined_call_operand.vmem [shape: bf16[256,256], index: 6, kind: input, shape index: {}]
  %s7 = inlined_call_operand.vmem [shape: f32[2,32,256], index: 7, kind: output, shape index: {}]
  %s8 = sld [smem:[#allocation0]]
  $region61: #{multiscale_feature_extractor.3} parent=0
    _
  %s10 = ssub.s32 1, %s8
  %s11 = scalar_select 0, %s10, %s8
  loop: start=0, step=1, limit=4
  $region2: #{multiscale_feature_extractor.3} parent=0 // loop_pre_header
    _
  $region3: #{multiscale_feature_extractor.3} parent=0 // loop_header
    %s13 = sphi 0, %s17
    %p14 = scmp.ge.s32.totalorder %s13, 4
    %s23 = sphi 0, %s25
    %s26 = sphi 0, %s23
    %s27 = sphi 0, %s26
    %s43 = sphi 0, %s27
    %s47 = sphi 0, %s47
    %s49 = sphi 0, %s47
    %s50 = sphi 0, %s49
    %s64 = sphi 0, %s50
    %s68 = sphi 0, %s68
    %s70 = sphi 0, %s68
    %s71 = sphi 0, %s70
    %s85 = sphi 0, %s71
    %s89 = sphi 0, %s89
    %s91 = sphi 0, %s89
    %s92 = sphi 0, %s91
    %s106 = sphi 0, %s92
    %s110 = sphi 0, %s110
    %s112 = sphi 0, %s110
    %s113 = sphi 0, %s112
    %s127 = sphi 0, %s113
    %s131 = sphi 0, %s131
    %s133 = sphi 0, %s131
    %s134 = sphi 0, %s133
    %s148 = sphi 0, %s134
    %s152 = sphi 0, %s152
    %s154 = sphi 0, %s152
    %s155 = sphi 0, %s154
    %s169 = sphi 0, %s155
    %s175 = sphi 0, %s177
    %s178 = sphi 0, %s175
    %s179 = sphi 0, %s178
    %s195 = sphi 0, %s179
  $region4: #{multiscale_feature_extractor.3} parent=0 // loop_header_branch
    %16 = sbr.rel (%p14) target = $region8
  $region5: #{multiscale_feature_extractor.3} parent=0 // loop_body
    %s18 = ssub.s32 %s13, 1
    %s19 = ssub.s32 %s13, 2
    %s20 = sadd.s32 %s13, 1
    %s21 = ssub.s32 %s13, %s20
    %p22 = scmp.eq.s32.totalorder %s21, 0
    %s24 = sadd.s32 %s23, 1
    %s25 = scalar_select %p22, %s23, %s24
    %p28 = pneg %p22
    %p29 = scmp.eq.s32.totalorder %s13, 1
    %p30 = por %p28, %p29
    %p31 = scmp.ne.s32.totalorder %s23, %s26
    %p32 = scmp.eq.s32.totalorder %s13, 0
    %p33 = por %p31, %p32
    %p34 = scmp.ne.s32.totalorder %s23, %s26
    %p35 = scmp.eq.s32.totalorder %s18, 1
    %p36 = por %p34, %p35
    %p37 = scmp.ne.s32.totalorder %s26, %s27
    %p38 = scmp.eq.s32.totalorder %s18, 0
    %p39 = por %p37, %p38
    %p40 = scmp.ne.s32.totalorder %s26, %s27
    %p41 = scmp.eq.s32.totalorder %s19, 1
    %p42 = por %p40, %p41
    %p44 = scmp.ne.s32.totalorder %s27, %s43
    %p45 = scmp.eq.s32.totalorder %s19, 0
    %p46 = por %p44, %p45
    %s48 = sadd.s32 %s47, 1
    %p51 = scmp.eq.s32.totalorder %s13, 1
    %p52 = scmp.ne.s32.totalorder %s47, %s49
    %p53 = scmp.eq.s32.totalorder %s13, 0
    %p54 = por %p52, %p53
    %p55 = scmp.ne.s32.totalorder %s47, %s49
    %p56 = scmp.eq.s32.totalorder %s18, 1
    %p57 = por %p55, %p56
    %p58 = scmp.ne.s32.totalorder %s49, %s50
    %p59 = scmp.eq.s32.totalorder %s18, 0
    %p60 = por %p58, %p59
    %p61 = scmp.ne.s32.totalorder %s49, %s50
    %p62 = scmp.eq.s32.totalorder %s19, 1
    %p63 = por %p61, %p62
    %p65 = scmp.ne.s32.totalorder %s50, %s64
    %p66 = scmp.eq.s32.totalorder %s19, 0
    %p67 = por %p65, %p66
    %s69 = sadd.s32 %s68, 1
    %p72 = scmp.eq.s32.totalorder %s13, 1
    %p73 = scmp.ne.s32.totalorder %s68, %s70
    %p74 = scmp.eq.s32.totalorder %s13, 0
    %p75 = por %p73, %p74
    %p76 = scmp.ne.s32.totalorder %s68, %s70
    %p77 = scmp.eq.s32.totalorder %s18, 1
    %p78 = por %p76, %p77
    %p79 = scmp.ne.s32.totalorder %s70, %s71
    %p80 = scmp.eq.s32.totalorder %s18, 0
    %p81 = por %p79, %p80
    %p82 = scmp.ne.s32.totalorder %s70, %s71
    %p83 = scmp.eq.s32.totalorder %s19, 1
    %p84 = por %p82, %p83
    %p86 = scmp.ne.s32.totalorder %s71, %s85
    %p87 = scmp.eq.s32.totalorder %s19, 0
    %p88 = por %p86, %p87
    %s90 = sadd.s32 %s89, 1
    %p93 = scmp.eq.s32.totalorder %s13, 1
    %p94 = scmp.ne.s32.totalorder %s89, %s91
    %p95 = scmp.eq.s32.totalorder %s13, 0
    %p96 = por %p94, %p95
    %p97 = scmp.ne.s32.totalorder %s89, %s91
    %p98 = scmp.eq.s32.totalorder %s18, 1
    %p99 = por %p97, %p98
    %p100 = scmp.ne.s32.totalorder %s91, %s92
    %p101 = scmp.eq.s32.totalorder %s18, 0
    %p102 = por %p100, %p101
    %p103 = scmp.ne.s32.totalorder %s91, %s92
    %p104 = scmp.eq.s32.totalorder %s19, 1
    %p105 = por %p103, %p104
    %p107 = scmp.ne.s32.totalorder %s92, %s106
    %p108 = scmp.eq.s32.totalorder %s19, 0
    %p109 = por %p107, %p108
    %s111 = sadd.s32 %s110, 1
    %p114 = scmp.eq.s32.totalorder %s13, 1
    %p115 = scmp.ne.s32.totalorder %s110, %s112
    %p116 = scmp.eq.s32.totalorder %s13, 0
    %p117 = por %p115, %p116
    %p118 = scmp.ne.s32.totalorder %s110, %s112
    %p119 = scmp.eq.s32.totalorder %s18, 1
    %p120 = por %p118, %p119
    %p121 = scmp.ne.s32.totalorder %s112, %s113
    %p122 = scmp.eq.s32.totalorder %s18, 0
    %p123 = por %p121, %p122
    %p124 = scmp.ne.s32.totalorder %s112, %s113
    %p125 = scmp.eq.s32.totalorder %s19, 1
    %p126 = por %p124, %p125
    %p128 = scmp.ne.s32.totalorder %s113, %s127
    %p129 = scmp.eq.s32.totalorder %s19, 0
    %p130 = por %p128, %p129
    %s132 = sadd.s32 %s131, 1
    %p135 = scmp.eq.s32.totalorder %s13, 1
    %p136 = scmp.ne.s32.totalorder %s131, %s133
    %p137 = scmp.eq.s32.totalorder %s13, 0
    %p138 = por %p136, %p137
    %p139 = scmp.ne.s32.totalorder %s131, %s133
    %p140 = scmp.eq.s32.totalorder %s18, 1
    %p141 = por %p139, %p140
    %p142 = scmp.ne.s32.totalorder %s133, %s134
    %p143 = scmp.eq.s32.totalorder %s18, 0
    %p144 = por %p142, %p143
    %p145 = scmp.ne.s32.totalorder %s133, %s134
    %p146 = scmp.eq.s32.totalorder %s19, 1
    %p147 = por %p145, %p146
    %p149 = scmp.ne.s32.totalorder %s134, %s148
    %p150 = scmp.eq.s32.totalorder %s19, 0
    %p151 = por %p149, %p150
    %s153 = sadd.s32 %s152, 1
    %p156 = scmp.eq.s32.totalorder %s13, 1
    %p157 = scmp.ne.s32.totalorder %s152, %s154
    %p158 = scmp.eq.s32.totalorder %s13, 0
    %p159 = por %p157, %p158
    %p160 = scmp.ne.s32.totalorder %s152, %s154
    %p161 = scmp.eq.s32.totalorder %s18, 1
    %p162 = por %p160, %p161
    %p163 = scmp.ne.s32.totalorder %s154, %s155
    %p164 = scmp.eq.s32.totalorder %s18, 0
    %p165 = por %p163, %p164
    %p166 = scmp.ne.s32.totalorder %s154, %s155
    %p167 = scmp.eq.s32.totalorder %s19, 1
    %p168 = por %p166, %p167
    %p170 = scmp.ne.s32.totalorder %s155, %s169
    %p171 = scmp.eq.s32.totalorder %s19, 0
    %p172 = por %p170, %p171
    %s173 = ssub.s32 %s13, %s20
    %p174 = scmp.eq.s32.totalorder %s173, 0
    %s176 = sadd.s32 %s175, 1
    %s177 = scalar_select %p174, %s175, %s176
    %p180 = pneg %p174
    %p181 = scmp.eq.s32.totalorder %s13, 1
    %p182 = por %p180, %p181
    %p183 = scmp.ne.s32.totalorder %s175, %s178
    %p184 = scmp.eq.s32.totalorder %s13, 0
    %p185 = por %p183, %p184
    %p186 = scmp.ne.s32.totalorder %s175, %s178
    %p187 = scmp.eq.s32.totalorder %s18, 1
    %p188 = por %p186, %p187
    %p189 = scmp.ne.s32.totalorder %s178, %s179
    %p190 = scmp.eq.s32.totalorder %s18, 0
    %p191 = por %p189, %p190
    %p192 = scmp.ne.s32.totalorder %s178, %s179
    %p193 = scmp.eq.s32.totalorder %s19, 1
    %p194 = por %p192, %p193
    %p196 = scmp.ne.s32.totalorder %s179, %s195
    %p197 = scmp.eq.s32.totalorder %s19, 0
    %p198 = por %p196, %p197
    %p199 = scmp.le.s32.totalorder 1, %s13
    %p200 = scmp.lt.s32.totalorder %s13, 3
    %p201 = pnand %p199, %p200
    %p202 = pneg %p201
    // Predicated region
    $region9: #{multiscale_feature_extractor.3} parent=5 // pred_check
      _
    $region10: #{multiscale_feature_extractor.3} parent=5 // pred_check_branch
      %204 = sbr.rel (%p201) target = $region12
    $region11: #{multiscale_feature_extractor.3} parent=5 // pred_region
      %s205 = ssub.s32 %s13, 1
      // Predicated region
      $region13: #{multiscale_feature_extractor.3} parent=11 // pred_check
        %p206 = pneg %p60
      $region14: #{multiscale_feature_extractor.3} parent=11 // pred_check_branch
        %208 = sbr.rel (%p206) target = $region16
      $region15: #{multiscale_feature_extractor.3} parent=11 // pred_region
        _
      $region16: #{multiscale_feature_extractor.3} parent=11 // pred_fallthru
        _
      // Predicated region
      $region17: #{multiscale_feature_extractor.3} parent=11 // pred_check
        %p209 = pneg %p81
      $region18: #{multiscale_feature_extractor.3} parent=11 // pred_check_branch
        %211 = sbr.rel (%p209) target = $region20
      $region19: #{multiscale_feature_extractor.3} parent=11 // pred_region
        _
      $region20: #{multiscale_feature_extractor.3} parent=11 // pred_fallthru
        _
      // Predicated region
      $region21: #{multiscale_feature_extractor.3} parent=11 // pred_check
        %p212 = pneg %p102
      $region22: #{multiscale_feature_extractor.3} parent=11 // pred_check_branch
        %214 = sbr.rel (%p212) target = $region24
      $region23: #{multiscale_feature_extractor.3} parent=11 // pred_region
        _
      $region24: #{multiscale_feature_extractor.3} parent=11 // pred_fallthru
        _
      // Predicated region
      $region25: #{multiscale_feature_extractor.3} parent=11 // pred_check
        %p215 = pneg %p123
      $region26: #{multiscale_feature_extractor.3} parent=11 // pred_check_branch
        %217 = sbr.rel (%p215) target = $region28
      $region27: #{multiscale_feature_extractor.3} parent=11 // pred_region
        _
      $region28: #{multiscale_feature_extractor.3} parent=11 // pred_fallthru
        _
      // Predicated region
      $region29: #{multiscale_feature_extractor.3} parent=11 // pred_check
        %p218 = pneg %p144
      $region30: #{multiscale_feature_extractor.3} parent=11 // pred_check_branch
        %220 = sbr.rel (%p218) target = $region32
      $region31: #{multiscale_feature_extractor.3} parent=11 // pred_region
        _
      $region32: #{multiscale_feature_extractor.3} parent=11 // pred_fallthru
        _
      // Predicated region
      $region33: #{multiscale_feature_extractor.3} parent=11 // pred_check
        %p221 = pneg %p165
      $region34: #{multiscale_feature_extractor.3} parent=11 // pred_check_branch
        %223 = sbr.rel (%p221) target = $region36
      $region35: #{multiscale_feature_extractor.3} parent=11 // pred_region
        _
      $region36: #{multiscale_feature_extractor.3} parent=11 // pred_fallthru
        _
    $region12: #{multiscale_feature_extractor.3} parent=5 // pred_fallthru
      _
    %p224 = scmp.lt.s32.totalorder %s13, 2
    // Predicated region
    $region37: #{multiscale_feature_extractor.3} parent=5 // pred_check
      %p225 = pneg %p224
    $region38: #{multiscale_feature_extractor.3} parent=5 // pred_check_branch
      %227 = sbr.rel (%p225) target = $region40
    $region39: #{multiscale_feature_extractor.3} parent=5 // pred_region
      // Predicated region
      $region41: #{multiscale_feature_extractor.3} parent=39 // pred_check
        %p228 = pneg %p33
      $region42: #{multiscale_feature_extractor.3} parent=39 // pred_check_branch
        %230 = sbr.rel (%p228) target = $region44
      $region43: #{multiscale_feature_extractor.3} parent=39 // pred_region
        %p231 = scmp.lt.s32.totalorder %s13, 1
        %s232 = scalar_select %p231, %s13, 1
        %s233 = smul.addr %s232, 8
        %s234 = smul.addr %s233, 4
        %s235 = scalar_lea.vmem %s0, %s234
      $region44: #{multiscale_feature_extractor.3} parent=39 // pred_fallthru
        _
    $region40: #{multiscale_feature_extractor.3} parent=5 // pred_fallthru
      _
    %p236 = scmp.le.s32.totalorder 1, %s13
    %p237 = scmp.lt.s32.totalorder %s13, 3
    %p238 = pnand %p236, %p237
    %p239 = pneg %p238
    // Predicated region
    $region45: #{multiscale_feature_extractor.3} parent=5 // pred_check
      _
    $region46: #{multiscale_feature_extractor.3} parent=5 // pred_check_branch
      %241 = sbr.rel (%p238) target = $region48
    $region47: #{multiscale_feature_extractor.3} parent=5 // pred_region
      %s242 = ssub.s32 %s13, 1
      %p243 = scmp.lt.s32.totalorder %s18, 1
      %s244 = scalar_select %p243, %s18, 1
      %s245 = smul.addr %s244, 8
      %s246 = smul.addr %s245, 4
      %s247 = scalar_lea.vmem %s0, %s246
      %p248 = pneg %p39
      %p249 = pneg %p36
      %p250 = pneg %p60
      %p251 = pneg %p57
      %p252 = pneg %p81
      %p253 = pneg %p78
      %p254 = pneg %p102
      %p255 = pneg %p99
      %p256 = pneg %p123
      %p257 = pneg %p120
      %p258 = pneg %p144
      %p259 = pneg %p141
      %p260 = pneg %p165
      %p261 = pneg %p162
      %p262 = pneg %p191
      %p263 = pneg %p188
      %p264 = scmp.lt.s32.totalorder %s18, 1
      %s265 = scalar_select %p264, %s18, 1
      %s266 = smul.addr %s265, 8
      %s267 = smul.addr %s266, 8
      %s268 = scalar_lea.vmem %s7, %s267
      %p269 = scmp.lt.s32.totalorder %s18, 1
      %s270 = scalar_select %p269, %s18, 1
      %s271 = smul.addr %s270, 8
      %s272 = smul.addr %s271, 4
      %s273 = scalar_lea.vmem %s0, %s272
      %p274 = scmp.lt.s32.totalorder %s18, 1
      %s275 = scalar_select %p274, %s18, 1
      %s276 = smul.addr %s275, 8
      %s277 = smul.addr %s276, 8
      %s278 = scalar_lea.vmem %s7, %s277
      %v279 = vld [vmem:[%s273] sm:$0xff]
      %v280 = vld [vmem:[%s273 + $0x8] sm:$0xff]
      %v281 = vld [vmem:[%s273 + $0x10] sm:$0xff]
      %v282 = vld [vmem:[%s273 + $0x18] sm:$0xff]
      %v283 = vunpack.c.l.bf16 %v279
      %v284 = vunpack.c.h.bf16 %v279
      %v285 = vunpack.c.l.bf16 %v280
      %v286 = vunpack.c.h.bf16 %v280
      %v287 = vunpack.c.l.bf16 %v281
      %v288 = vunpack.c.h.bf16 %v281
      %v289 = vunpack.c.l.bf16 %v282
      %v290 = vunpack.c.h.bf16 %v282
      %v291 = vld [vmem:[%s1] sm:$0xff]
      %v292 = vld [vmem:[%s1 + $0x8] sm:$0xff]
      %v293 = vld [vmem:[%s1 + $0x10] sm:$0xff]
      %v294 = vld [vmem:[%s1 + $0x18] sm:$0xff]
      %296 = vset.pattern.permute.xlu0 0
      %297 = vperm.xlu0 %296, %v291
      %v298 = vpop.permute.xlu0 %297
      %301 = vset.pattern.permute.xlu0 0
      %302 = vperm.xlu0 %301, %v292
      %v303 = vpop.permute.xlu0 %302
      %306 = vset.pattern.permute.xlu0 0
      %307 = vperm.xlu0 %306, %v293
      %v308 = vpop.permute.xlu0 %307
      %311 = vset.pattern.permute.xlu0 0
      %312 = vperm.xlu0 %311, %v294
      %v313 = vpop.permute.xlu0 %312
      %v315 = vmul.f32 %v283, %v298
      %v316 = vmul.f32 %v284, %v298
      %v317 = vmul.f32 %v285, %v303
      %v318 = vmul.f32 %v286, %v303
      %v319 = vmul.f32 %v287, %v308
      %v320 = vmul.f32 %v288, %v308
      %v321 = vmul.f32 %v289, %v313
      %v322 = vmul.f32 %v290, %v313
      %v323 = vld [vmem:[%s2] sm:$0xff]
      %v324 = vld [vmem:[%s2 + $0x8] sm:$0xff]
      %v325 = vld [vmem:[%s2 + $0x10] sm:$0xff]
      %v326 = vld [vmem:[%s2 + $0x18] sm:$0xff]
      %328 = vset.pattern.permute.xlu0 0
      %329 = vperm.xlu0 %328, %v323
      %v330 = vpop.permute.xlu0 %329
      %333 = vset.pattern.permute.xlu0 0
      %334 = vperm.xlu0 %333, %v324
      %v335 = vpop.permute.xlu0 %334
      %338 = vset.pattern.permute.xlu0 0
      %339 = vperm.xlu0 %338, %v325
      %v340 = vpop.permute.xlu0 %339
      %343 = vset.pattern.permute.xlu0 0
      %344 = vperm.xlu0 %343, %v326
      %v345 = vpop.permute.xlu0 %344
      %v347 = vadd.f32 %v315, %v330
      %v348 = vadd.f32 %v316, %v330
      %v349 = vadd.f32 %v317, %v335
      %v350 = vadd.f32 %v318, %v335
      %v351 = vadd.f32 %v319, %v340
      %v352 = vadd.f32 %v320, %v340
      %v353 = vadd.f32 %v321, %v345
      %v354 = vadd.f32 %v322, %v345
      %v355 = vmax.f32 %v347, 0.0
      %v356 = vmax.f32 %v348, 0.0
      %v357 = vmax.f32 %v349, 0.0
      %v358 = vmax.f32 %v350, 0.0
      %v359 = vmax.f32 %v351, 0.0
      %v360 = vmax.f32 %v352, 0.0
      %v361 = vmax.f32 %v353, 0.0
      %v362 = vmax.f32 %v354, 0.0
      %v363 = vadd.f32 %v355, %v356
      %364 = vadd.xlane.f32.xlu0 %v363
      %v365 = vpop.xlane.xlu0 %364
      %v366 = vadd.f32 %v357, %v358
      %367 = vadd.xlane.f32.xlu0 %v366
      %v368 = vpop.xlane.xlu0 %367
      %v369 = vadd.f32 %v359, %v360
      %370 = vadd.xlane.f32.xlu0 %v369
      %v371 = vpop.xlane.xlu0 %370
      %v372 = vadd.f32 %v361, %v362
      %373 = vadd.xlane.f32.xlu0 %v372
      %v374 = vpop.xlane.xlu0 %373
      %v375 = vrcp.pop 256.0
      %v376 = vmul.f32 %v365, %v375
      %v377 = vmul.f32 %v368, %v375
      %v378 = vmul.f32 %v371, %v375
      %v379 = vmul.f32 %v374, %v375
      %v380 = vmax.f32 %v355, %v356
      %381 = vmax.xlane.f32.xlu0 %v380
      %v382 = vpop.xlane.xlu0 %381
      %v383 = vmax.f32 %v357, %v358
      %384 = vmax.xlane.f32.xlu0 %v383
      %v385 = vpop.xlane.xlu0 %384
      %v386 = vmax.f32 %v359, %v360
      %387 = vmax.xlane.f32.xlu0 %v386
      %v388 = vpop.xlane.xlu0 %387
      %v389 = vmax.f32 %v361, %v362
      %390 = vmax.xlane.f32.xlu0 %v389
      %v391 = vpop.xlane.xlu0 %390
      %v392 = vld [vmem:[%s3] sm:$0x3]
      %v393 = vld [vmem:[%s4] sm:$0xff]
      %v394 = vld [vmem:[%s4 + $0x8] sm:$0xff]
      %v395 = vld [vmem:[%s4 + $0x10] sm:$0xff]
      %v396 = vld [vmem:[%s4 + $0x18] sm:$0xff]
      %vm397 = vcmask 261120
      %v399 = vsel %vm397, %v392, 0
      %401 = vmatprep.subr.mxu0 0.0
      %402 = vmatpush1.msra.mxu0 %v376
      %403 = vmatprep.subr.mxu0 0.0
      %404 = vmatpush1.msra.mxu0 %v377
      %405 = vmatprep.subr.mxu0 0.0
      %406 = vmatpush1.msra.mxu0 %v378
      %407 = vmatprep.subr.mxu0 0.0
      %408 = vmatpush1.msra.mxu0 %v379
      %409 = vmatprep.subr.mxu0 0.0
      %410 = vmatpush1.msra.mxu0 0.0
      %411 = vmatprep.subr.mxu0 0.0
      %412 = vmatpush1.msra.mxu0 0.0
      %413 = vmatprep.subr.mxu0 0.0
      %414 = vmatpush1.msra.mxu0 0.0
      %415 = vmatprep.subr.mxu0 0.0
      %416 = vmatpush1.msra.mxu0 0.0
      %417 = vmatprep.subr.mxu0 0.0
      %418 = vmatpush1.msra.mxu0 0.0
      %419 = vmatprep.subr.mxu0 0.0
      %420 = vmatpush1.msra.mxu0 0.0
      %421 = vmatprep.subr.mxu0 0.0
      %422 = vmatpush1.msra.mxu0 0.0
      %423 = vmatprep.subr.mxu0 0.0
      %424 = vmatpush1.msra.mxu0 0.0
      %425 = vmatprep.subr.mxu0 0.0
      %426 = vmatpush1.msra.mxu0 0.0
      %427 = vmatprep.subr.mxu0 0.0
      %428 = vmatpush1.msra.mxu0 0.0
      %429 = vmatprep.subr.mxu0 0.0
      %430 = vmatpush1.msra.mxu0 0.0
      %431 = vmatprep.subr.mxu0 0.0
      %432 = vmatpush1.msra.mxu0 0.0
      %433 = vmatprep.subr.mxu0 0.0
      %434 = vmatpush1.msra.mxu0 0.0
      %435 = vmatprep.subr.mxu0 0.0
      %436 = vmatpush1.msra.mxu0 0.0
      %437 = vmatprep.subr.mxu0 0.0
      %438 = vmatpush1.msra.mxu0 0.0
      %439 = vmatprep.subr.mxu0 0.0
      %440 = vmatpush1.msra.mxu0 0.0
      %441 = vmatprep.subr.mxu0 0.0
      %442 = vmatpush1.msra.mxu0 0.0
      %443 = vmatprep.subr.mxu0 0.0
      %444 = vmatpush1.msra.mxu0 0.0
      %445 = vmatprep.subr.mxu0 0.0
      %446 = vmatpush1.msra.mxu0 0.0
      %447 = vmatprep.subr.mxu0 0.0
      %448 = vmatpush1.msra.mxu0 0.0
      %449 = vmatprep.subr.mxu0 0.0
      %450 = vmatpush1.msra.mxu0 0.0
      %451 = vmatprep.subr.mxu0 0.0
      %452 = vmatpush1.msra.mxu0 0.0
      %453 = vmatprep.subr.mxu0 0.0
      %454 = vmatpush1.msra.mxu0 0.0
      %455 = vmatprep.subr.mxu0 0.0
      %456 = vmatpush1.msra.mxu0 0.0
      %457 = vmatprep.subr.mxu0 0.0
      %458 = vmatpush1.msra.mxu0 0.0
      %459 = vmatprep.subr.mxu0 0.0
      %460 = vmatpush1.msra.mxu0 0.0
      %461 = vmatprep.subr.mxu0 0.0
      %462 = vmatpush1.msra.mxu0 0.0
      %463 = vmatprep.subr.mxu0 0.0
      %464 = vmatpush1.msra.mxu0 0.0
      %465 = vmatprep.mubr.f32.mxu0 0.0
      %466 = vmatmul.mubr.f32.gmra.mrb[0].mxu0 %v399
      %v467 = vpop.f32.mrb[0].mxu0
      %v468 = vadd.f32 0.0, %v467
      %v469 = vpop.f32.mrb[0].mxu0
      %470 = vdwg.mxu0
      %v471 = vmax.f32 %v468, 0.0
      %472 = vmatprep.subr.mxu0 0.0
      %473 = vmatpush1.msra.mxu0 %v382
      %474 = vmatprep.subr.mxu0 0.0
      %475 = vmatpush1.msra.mxu0 %v385
      %476 = vmatprep.subr.mxu0 0.0
      %477 = vmatpush1.msra.mxu0 %v388
      %478 = vmatprep.subr.mxu0 0.0
      %479 = vmatpush1.msra.mxu0 %v391
      %480 = vmatprep.subr.mxu0 0.0
      %481 = vmatpush1.msra.mxu0 0.0
      %482 = vmatprep.subr.mxu0 0.0
      %483 = vmatpush1.msra.mxu0 0.0
      %484 = vmatprep.subr.mxu0 0.0
      %485 = vmatpush1.msra.mxu0 0.0
      %486 = vmatprep.subr.mxu0 0.0
      %487 = vmatpush1.msra.mxu0 0.0
      %488 = vmatprep.subr.mxu0 0.0
      %489 = vmatpush1.msra.mxu0 0.0
      %490 = vmatprep.subr.mxu0 0.0
      %491 = vmatpush1.msra.mxu0 0.0
      %492 = vmatprep.subr.mxu0 0.0
      %493 = vmatpush1.msra.mxu0 0.0
      %494 = vmatprep.subr.mxu0 0.0
      %495 = vmatpush1.msra.mxu0 0.0
      %496 = vmatprep.subr.mxu0 0.0
      %497 = vmatpush1.msra.mxu0 0.0
      %498 = vmatprep.subr.mxu0 0.0
      %499 = vmatpush1.msra.mxu0 0.0
      %500 = vmatprep.subr.mxu0 0.0
      %501 = vmatpush1.msra.mxu0 0.0
      %502 = vmatprep.subr.mxu0 0.0
      %503 = vmatpush1.msra.mxu0 0.0
      %504 = vmatprep.subr.mxu0 0.0
      %505 = vmatpush1.msra.mxu0 0.0
      %506 = vmatprep.subr.mxu0 0.0
      %507 = vmatpush1.msra.mxu0 0.0
      %508 = vmatprep.subr.mxu0 0.0
      %509 = vmatpush1.msra.mxu0 0.0
      %510 = vmatprep.subr.mxu0 0.0
      %511 = vmatpush1.msra.mxu0 0.0
      %512 = vmatprep.subr.mxu0 0.0
      %513 = vmatpush1.msra.mxu0 0.0
      %514 = vmatprep.subr.mxu0 0.0
      %515 = vmatpush1.msra.mxu0 0.0
      %516 = vmatprep.subr.mxu0 0.0
      %517 = vmatpush1.msra.mxu0 0.0
      %518 = vmatprep.subr.mxu0 0.0
      %519 = vmatpush1.msra.mxu0 0.0
      %520 = vmatprep.subr.mxu0 0.0
      %521 = vmatpush1.msra.mxu0 0.0
      %522 = vmatprep.subr.mxu0 0.0
      %523 = vmatpush1.msra.mxu0 0.0
      %524 = vmatprep.subr.mxu0 0.0
      %525 = vmatpush1.msra.mxu0 0.0
      %526 = vmatprep.subr.mxu0 0.0
      %527 = vmatpush1.msra.mxu0 0.0
      %528 = vmatprep.subr.mxu0 0.0
      %529 = vmatpush1.msra.mxu0 0.0
      %530 = vmatprep.subr.mxu0 0.0
      %531 = vmatpush1.msra.mxu0 0.0
      %532 = vmatprep.subr.mxu0 0.0
      %533 = vmatpush1.msra.mxu0 0.0
      %534 = vmatprep.subr.mxu0 0.0
      %535 = vmatpush1.msra.mxu0 0.0
      %536 = vmatprep.mubr.f32.mxu0 0.0
      %537 = vmatmul.mubr.f32.gmra.mrb[0].mxu0 %v399
      %v538 = vpop.f32.mrb[0].mxu0
      %v539 = vadd.f32 0.0, %v538
      %v540 = vpop.f32.mrb[0].mxu0
      %541 = vdwg.mxu0
      %v542 = vmax.f32 %v539, 0.0
      %vm543 = vcmask 15360
      %v545 = vsel %vm543, %v393, 0
      %v548 = vsel %vm543, %v394, 0
      %v551 = vsel %vm543, %v395, 0
      %v554 = vsel %vm543, %v396, 0
      %vm556 = vcmask 1041408
      %v558 = vsel %vm556, %v542, 0
      %560 = vmatprep.subr.mxu0 0.0
      %561 = vmatpush1.msra.mxu0 %v558
      %562 = vmatprep.subr.mxu0 0.0
      %563 = vmatpush1.msra.mxu0 0.0
      %564 = vmatprep.subr.mxu0 0.0
      %565 = vmatpush1.msra.mxu0 0.0
      %566 = vmatprep.subr.mxu0 0.0
      %567 = vmatpush1.msra.mxu0 0.0
      %568 = vmatprep.subr.mxu0 0.0
      %569 = vmatpush1.msra.mxu0 0.0
      %570 = vmatprep.subr.mxu0 0.0
      %571 = vmatpush1.msra.mxu0 0.0
      %572 = vmatprep.subr.mxu0 0.0
      %573 = vmatpush1.msra.mxu0 0.0
      %574 = vmatprep.subr.mxu0 0.0
      %575 = vmatpush1.msra.mxu0 0.0
      %576 = vmatprep.subr.mxu0 0.0
      %577 = vmatpush1.msra.mxu0 0.0
      %578 = vmatprep.subr.mxu0 0.0
      %579 = vmatpush1.msra.mxu0 0.0
      %580 = vmatprep.subr.mxu0 0.0
      %581 = vmatpush1.msra.mxu0 0.0
      %582 = vmatprep.subr.mxu0 0.0
      %583 = vmatpush1.msra.mxu0 0.0
      %584 = vmatprep.subr.mxu0 0.0
      %585 = vmatpush1.msra.mxu0 0.0
      %586 = vmatprep.subr.mxu0 0.0
      %587 = vmatpush1.msra.mxu0 0.0
      %588 = vmatprep.subr.mxu0 0.0
      %589 = vmatpush1.msra.mxu0 0.0
      %590 = vmatprep.subr.mxu0 0.0
      %591 = vmatpush1.msra.mxu0 0.0
      %592 = vmatprep.subr.mxu0 0.0
      %593 = vmatpush1.msra.mxu0 0.0
      %594 = vmatprep.subr.mxu0 0.0
      %595 = vmatpush1.msra.mxu0 0.0
      %596 = vmatprep.subr.mxu0 0.0
      %597 = vmatpush1.msra.mxu0 0.0
      %598 = vmatprep.subr.mxu0 0.0
      %599 = vmatpush1.msra.mxu0 0.0
      %600 = vmatprep.subr.mxu0 0.0
      %601 = vmatpush1.msra.mxu0 0.0
      %602 = vmatprep.subr.mxu0 0.0
      %603 = vmatpush1.msra.mxu0 0.0
      %604 = vmatprep.subr.mxu0 0.0
      %605 = vmatpush1.msra.mxu0 0.0
      %606 = vmatprep.subr.mxu0 0.0
      %607 = vmatpush1.msra.mxu0 0.0
      %608 = vmatprep.subr.mxu0 0.0
      %609 = vmatpush1.msra.mxu0 0.0
      %610 = vmatprep.subr.mxu0 0.0
      %611 = vmatpush1.msra.mxu0 0.0
      %612 = vmatprep.subr.mxu0 0.0
      %613 = vmatpush1.msra.mxu0 0.0
      %614 = vmatprep.subr.mxu0 0.0
      %615 = vmatpush1.msra.mxu0 0.0
      %616 = vmatprep.subr.mxu0 0.0
      %617 = vmatpush1.msra.mxu0 0.0
      %618 = vmatprep.subr.mxu0 0.0
      %619 = vmatpush1.msra.mxu0 0.0
      %620 = vmatprep.subr.mxu0 0.0
      %621 = vmatpush1.msra.mxu0 0.0
      %622 = vmatprep.subr.mxu0 0.0
      %623 = vmatpush1.msra.mxu0 0.0
      %624 = vmatprep.mubr.f32.mxu0 0.0
      %625 = vmatmul.mubr.f32.gmra.mrb[0].mxu0 %v545
      %v626 = vpop.f32.mrb[0].mxu0
      %v627 = vadd.f32 0.0, %v626
      %v628 = vpop.f32.mrb[0].mxu0
      %629 = vmatprep.mubr.f32.mxu0 0.0
      %630 = vmatmul.mubr.f32.gmra.mrb[0].mxu0 %v548
      %v631 = vpop.f32.mrb[0].mxu0
      %v632 = vadd.f32 0.0, %v631
      %v633 = vpop.f32.mrb[0].mxu0
      %634 = vmatprep.mubr.f32.mxu0 0.0
      %635 = vmatmul.mubr.f32.gmra.mrb[0].mxu0 %v551
      %v636 = vpop.f32.mrb[0].mxu0
      %v637 = vadd.f32 0.0, %v636
      %v638 = vpop.f32.mrb[0].mxu0
      %639 = vmatprep.mubr.f32.mxu0 0.0
      %640 = vmatmul.mubr.f32.gmra.mrb[0].mxu0 %v554
      %v641 = vpop.f32.mrb[0].mxu0
      %v642 = vadd.f32 0.0, %v641
      %v643 = vpop.f32.mrb[0].mxu0
      %644 = vdwg.mxu0
      %v646 = vsel %vm556, %v471, 0
      %648 = vmatprep.subr.mxu0 0.0
      %649 = vmatpush1.msra.mxu0 %v646
      %650 = vmatprep.subr.mxu0 0.0
      %651 = vmatpush1.msra.mxu0 0.0
      %652 = vmatprep.subr.mxu0 0.0
      %653 = vmatpush1.msra.mxu0 0.0
      %654 = vmatprep.subr.mxu0 0.0
      %655 = vmatpush1.msra.mxu0 0.0
      %656 = vmatprep.subr.mxu0 0.0
      %657 = vmatpush1.msra.mxu0 0.0
      %658 = vmatprep.subr.mxu0 0.0
      %659 = vmatpush1.msra.mxu0 0.0
      %660 = vmatprep.subr.mxu0 0.0
      %661 = vmatpush1.msra.mxu0 0.0
      %662 = vmatprep.subr.mxu0 0.0
      %663 = vmatpush1.msra.mxu0 0.0
      %664 = vmatprep.subr.mxu0 0.0
      %665 = vmatpush1.msra.mxu0 0.0
      %666 = vmatprep.subr.mxu0 0.0
      %667 = vmatpush1.msra.mxu0 0.0
      %668 = vmatprep.subr.mxu0 0.0
      %669 = vmatpush1.msra.mxu0 0.0
      %670 = vmatprep.subr.mxu0 0.0
      %671 = vmatpush1.msra.mxu0 0.0
      %672 = vmatprep.subr.mxu0 0.0
      %673 = vmatpush1.msra.mxu0 0.0
      %674 = vmatprep.subr.mxu0 0.0
      %675 = vmatpush1.msra.mxu0 0.0
      %676 = vmatprep.subr.mxu0 0.0
      %677 = vmatpush1.msra.mxu0 0.0
      %678 = vmatprep.subr.mxu0 0.0
      %679 = vmatpush1.msra.mxu0 0.0
      %680 = vmatprep.subr.mxu0 0.0
      %681 = vmatpush1.msra.mxu0 0.0
      %682 = vmatprep.subr.mxu0 0.0
      %683 = vmatpush1.msra.mxu0 0.0
      %684 = vmatprep.subr.mxu0 0.0
      %685 = vmatpush1.msra.mxu0 0.0
      %686 = vmatprep.subr.mxu0 0.0
      %687 = vmatpush1.msra.mxu0 0.0
      %688 = vmatprep.subr.mxu0 0.0
      %689 = vmatpush1.msra.mxu0 0.0
      %690 = vmatprep.subr.mxu0 0.0
      %691 = vmatpush1.msra.mxu0 0.0
      %692 = vmatprep.subr.mxu0 0.0
      %693 = vmatpush1.msra.mxu0 0.0
      %694 = vmatprep.subr.mxu0 0.0
      %695 = vmatpush1.msra.mxu0 0.0
      %696 = vmatprep.subr.mxu0 0.0
      %697 = vmatpush1.msra.mxu0 0.0
      %698 = vmatprep.subr.mxu0 0.0
      %699 = vmatpush1.msra.mxu0 0.0
      %700 = vmatprep.subr.mxu0 0.0
      %701 = vmatpush1.msra.mxu0 0.0
      %702 = vmatprep.subr.mxu0 0.0
      %703 = vmatpush1.msra.mxu0 0.0
      %704 = vmatprep.subr.mxu0 0.0
      %705 = vmatpush1.msra.mxu0 0.0
      %706 = vmatprep.subr.mxu0 0.0
      %707 = vmatpush1.msra.mxu0 0.0
      %708 = vmatprep.subr.mxu0 0.0
      %709 = vmatpush1.msra.mxu0 0.0
      %710 = vmatprep.subr.mxu0 0.0
      %711 = vmatpush1.msra.mxu0 0.0
      %712 = vmatprep.mubr.f32.mxu0 0.0
      %713 = vmatmul.mubr.f32.gmra.mrb[0].mxu0 %v545
      %v714 = vpop.f32.mrb[0].mxu0
      %v715 = vadd.f32 %v627, %v714
      %v716 = vpop.f32.mrb[0].mxu0
      %717 = vmatprep.mubr.f32.mxu0 0.0
      %718 = vmatmul.mubr.f32.gmra.mrb[0].mxu0 %v548
      %v719 = vpop.f32.mrb[0].mxu0
      %v720 = vadd.f32 %v632, %v719
      %v721 = vpop.f32.mrb[0].mxu0
      %722 = vmatprep.mubr.f32.mxu0 0.0
      %723 = vmatmul.mubr.f32.gmra.mrb[0].mxu0 %v551
      %v724 = vpop.f32.mrb[0].mxu0
      %v725 = vadd.f32 %v637, %v724
      %v726 = vpop.f32.mrb[0].mxu0
      %727 = vmatprep.mubr.f32.mxu0 0.0
      %728 = vmatmul.mubr.f32.gmra.mrb[0].mxu0 %v554
      %v729 = vpop.f32.mrb[0].mxu0
      %v730 = vadd.f32 %v642, %v729
      %v731 = vpop.f32.mrb[0].mxu0
      %732 = vdwg.mxu0
      %v733 = vsub.f32 0.0, %v715
      %v734 = vsub.f32 0.0, %v720
      %v735 = vsub.f32 0.0, %v725
      %v736 = vsub.f32 0.0, %v730
      %v737 = vmul.f32 %v733, 1.442695
      %v738 = vpow.pop %v737
      %v739 = vmul.f32 %v734, 1.442695
      %v740 = vpow.pop %v739
      %v741 = vmul.f32 %v735, 1.442695
      %v742 = vpow.pop %v741
      %v743 = vmul.f32 %v736, 1.442695
      %v744 = vpow.pop %v743
      %v745 = vadd.f32 %v738, 1.0
      %v746 = vadd.f32 %v740, 1.0
      %v747 = vadd.f32 %v742, 1.0
      %v748 = vadd.f32 %v744, 1.0
      %v749 = vrcp.pop %v745
      %v750 = vrcp.pop %v746
      %v751 = vrcp.pop %v747
      %v752 = vrcp.pop %v748
      %754 = vset.pattern.permute.xlu0 0
      %755 = vperm.xlu0 %754, %v749
      %v756 = vpop.permute.xlu0 %755
      %759 = vset.pattern.permute.xlu0 0
      %760 = vperm.xlu0 %759, %v750
      %v761 = vpop.permute.xlu0 %760
      %764 = vset.pattern.permute.xlu0 0
      %765 = vperm.xlu0 %764, %v751
      %v766 = vpop.permute.xlu0 %765
      %769 = vset.pattern.permute.xlu0 0
      %770 = vperm.xlu0 %769, %v752
      %v771 = vpop.permute.xlu0 %770
      %v773 = vmul.f32 %v355, %v756
      %v774 = vmul.f32 %v356, %v756
      %v775 = vmul.f32 %v357, %v761
      %v776 = vmul.f32 %v358, %v761
      %v777 = vmul.f32 %v359, %v766
      %v778 = vmul.f32 %v360, %v766
      %v779 = vmul.f32 %v361, %v771
      %v780 = vmul.f32 %v362, %v771
      %v781 = vadd.f32 %v773, %v775
      %v782 = vadd.f32 %v781, %v777
      %v783 = vadd.f32 %v782, %v779
      %v784 = vrot.slane %v783, 4
      %v785 = vadd.f32 %v783, %v784
      %v786 = vrot.slane %v785, 2
      %v787 = vadd.f32 %v785, %v786
      %v788 = vrot.slane %v787, 1
      %v789 = vadd.f32 %v787, %v788
      %v790 = vadd.f32 %v774, %v776
      %v791 = vadd.f32 %v790, %v778
      %v792 = vadd.f32 %v791, %v780
      %v793 = vrot.slane %v792, 4
      %v794 = vadd.f32 %v792, %v793
      %v795 = vrot.slane %v794, 2
      %v796 = vadd.f32 %v794, %v795
      %v797 = vrot.slane %v796, 1
      %v798 = vadd.f32 %v796, %v797
      %v799 = vrcp.pop 32.0
      %v800 = vmul.f32 %v789, %v799
      %v801 = vmul.f32 %v798, %v799
      %v802 = vpack.c.bf16 %v800, %v800
      %v803 = vpack.c.bf16 %v801, %v801
      %v804 = vmax.f32 %v773, %v777
      %v805 = vmax.f32 %v775, %v779
      %v806 = vmax.f32 %v804, %v805
      %v807 = vrot.slane %v806, 4
      %v808 = vmax.f32 %v806, %v807
      %v809 = vrot.slane %v808, 2
      %v810 = vmax.f32 %v808, %v809
      %v811 = vrot.slane %v810, 1
      %v812 = vmax.f32 %v810, %v811
      %v813 = vmax.f32 %v774, %v778
      %v814 = vmax.f32 %v776, %v780
      %v815 = vmax.f32 %v813, %v814
      %v816 = vrot.slane %v815, 4
      %v817 = vmax.f32 %v815, %v816
      %v818 = vrot.slane %v817, 2
      %v819 = vmax.f32 %v817, %v818
      %v820 = vrot.slane %v819, 1
      %v821 = vmax.f32 %v819, %v820
      %v822 = vpack.c.bf16 %v812, %v812
      %v823 = vpack.c.bf16 %v821, %v821
      %v824 = vld [vmem:[%s5] sm:$0xff]
      %v825 = vld [vmem:[%s5 + $0x8] sm:$0xff]
      %v826 = vld [vmem:[%s5 + $0x10] sm:$0xff]
      %v827 = vld [vmem:[%s5 + $0x18] sm:$0xff]
      %v828 = vld [vmem:[%s5 + $0x20] sm:$0xff]
      %v829 = vld [vmem:[%s5 + $0x28] sm:$0xff]
      %v830 = vld [vmem:[%s5 + $0x30] sm:$0xff]
      %v831 = vld [vmem:[%s5 + $0x38] sm:$0xff]
      %v832 = vld [vmem:[%s5 + $0x40] sm:$0xff]
      %v833 = vld [vmem:[%s5 + $0x48] sm:$0xff]
      %v834 = vld [vmem:[%s5 + $0x50] sm:$0xff]
      %v835 = vld [vmem:[%s5 + $0x58] sm:$0xff]
      %v836 = vld [vmem:[%s5 + $0x60] sm:$0xff]
      %v837 = vld [vmem:[%s5 + $0x68] sm:$0xff]
      %v838 = vld [vmem:[%s5 + $0x70] sm:$0xff]
      %v839 = vld [vmem:[%s5 + $0x78] sm:$0xff]
      %v840 = vld [vmem:[%s5 + $0x80] sm:$0xff]
      %v841 = vld [vmem:[%s5 + $0x88] sm:$0xff]
      %v842 = vld [vmem:[%s5 + $0x90] sm:$0xff]
      %v843 = vld [vmem:[%s5 + $0x98] sm:$0xff]
      %v844 = vld [vmem:[%s5 + $0xa0] sm:$0xff]
      %v845 = vld [vmem:[%s5 + $0xa8] sm:$0xff]
      %v846 = vld [vmem:[%s5 + $0xb0] sm:$0xff]
      %v847 = vld [vmem:[%s5 + $0xb8] sm:$0xff]
      %v848 = vld [vmem:[%s5 + $0xc0] sm:$0xff]
      %v849 = vld [vmem:[%s5 + $0xc8] sm:$0xff]
      %v850 = vld [vmem:[%s5 + $0xd0] sm:$0xff]
      %v851 = vld [vmem:[%s5 + $0xd8] sm:$0xff]
      %v852 = vld [vmem:[%s5 + $0xe0] sm:$0xff]
      %v853 = vld [vmem:[%s5 + $0xe8] sm:$0xff]
      %v854 = vld [vmem:[%s5 + $0xf0] sm:$0xff]
      %v855 = vld [vmem:[%s5 + $0xf8] sm:$0xff]
      %v856 = vld [vmem:[%s6] sm:$0xff]
      %v857 = vld [vmem:[%s6 + $0x8] sm:$0xff]
      %v858 = vld [vmem:[%s6 + $0x10] sm:$0xff]
      %v859 = vld [vmem:[%s6 + $0x18] sm:$0xff]
      %v860 = vld [vmem:[%s6 + $0x20] sm:$0xff]
      %v861 = vld [vmem:[%s6 + $0x28] sm:$0xff]
      %v862 = vld [vmem:[%s6 + $0x30] sm:$0xff]
      %v863 = vld [vmem:[%s6 + $0x38] sm:$0xff]
      %v864 = vld [vmem:[%s6 + $0x40] sm:$0xff]
      %v865 = vld [vmem:[%s6 + $0x48] sm:$0xff]
      %v866 = vld [vmem:[%s6 + $0x50] sm:$0xff]
      %v867 = vld [vmem:[%s6 + $0x58] sm:$0xff]
      %v868 = vld [vmem:[%s6 + $0x60] sm:$0xff]
      %v869 = vld [vmem:[%s6 + $0x68] sm:$0xff]
      %v870 = vld [vmem:[%s6 + $0x70] sm:$0xff]
      %v871 = vld [vmem:[%s6 + $0x78] sm:$0xff]
      %v872 = vld [vmem:[%s6 + $0x80] sm:$0xff]
      %v873 = vld [vmem:[%s6 + $0x88] sm:$0xff]
      %v874 = vld [vmem:[%s6 + $0x90] sm:$0xff]
      %v875 = vld [vmem:[%s6 + $0x98] sm:$0xff]
      %v876 = vld [vmem:[%s6 + $0xa0] sm:$0xff]
      %v877 = vld [vmem:[%s6 + $0xa8] sm:$0xff]
      %v878 = vld [vmem:[%s6 + $0xb0] sm:$0xff]
      %v879 = vld [vmem:[%s6 + $0xb8] sm:$0xff]
      %v880 = vld [vmem:[%s6 + $0xc0] sm:$0xff]
      %v881 = vld [vmem:[%s6 + $0xc8] sm:$0xff]
      %v882 = vld [vmem:[%s6 + $0xd0] sm:$0xff]
      %v883 = vld [vmem:[%s6 + $0xd8] sm:$0xff]
      %v884 = vld [vmem:[%s6 + $0xe0] sm:$0xff]
      %v885 = vld [vmem:[%s6 + $0xe8] sm:$0xff]
      %v886 = vld [vmem:[%s6 + $0xf0] sm:$0xff]
      %v887 = vld [vmem:[%s6 + $0xf8] sm:$0xff]
      %v920 = vunpack.c.l.b16 %v856
      %v921 = vunpack.c.h.b16 %v856
      %v922 = vunpack.c.l.b16 %v857
      %v923 = vunpack.c.h.b16 %v857
      %v924 = vunpack.c.l.b16 %v858
      %v925 = vunpack.c.h.b16 %v858
      %v926 = vunpack.c.l.b16 %v859
      %v927 = vunpack.c.h.b16 %v859
      %v928 = vunpack.c.l.b16 %v860
      %v929 = vunpack.c.h.b16 %v860
      %v930 = vunpack.c.l.b16 %v861
      %v931 = vunpack.c.h.b16 %v861
      %v932 = vunpack.c.l.b16 %v862
      %v933 = vunpack.c.h.b16 %v862
      %v934 = vunpack.c.l.b16 %v863
      %v935 = vunpack.c.h.b16 %v863
      %v936 = vunpack.c.l.b16 %v864
      %v937 = vunpack.c.h.b16 %v864
      %v938 = vunpack.c.l.b16 %v865
      %v939 = vunpack.c.h.b16 %v865
      %v940 = vunpack.c.l.b16 %v866
      %v941 = vunpack.c.h.b16 %v866
      %v942 = vunpack.c.l.b16 %v867
      %v943 = vunpack.c.h.b16 %v867
      %v944 = vunpack.c.l.b16 %v868
      %v945 = vunpack.c.h.b16 %v868
      %v946 = vunpack.c.l.b16 %v869
      %v947 = vunpack.c.h.b16 %v869
      %v948 = vunpack.c.l.b16 %v870
      %v949 = vunpack.c.h.b16 %v870
      %v950 = vunpack.c.l.b16 %v871
      %v951 = vunpack.c.h.b16 %v871
      %v952 = vunpack.c.l.b16 %v872
      %v953 = vunpack.c.h.b16 %v872
      %v954 = vunpack.c.l.b16 %v873
      %v955 = vunpack.c.h.b16 %v873
      %v956 = vunpack.c.l.b16 %v874
      %v957 = vunpack.c.h.b16 %v874
      %v958 = vunpack.c.l.b16 %v875
      %v959 = vunpack.c.h.b16 %v875
      %v960 = vunpack.c.l.b16 %v876
      %v961 = vunpack.c.h.b16 %v876
      %v962 = vunpack.c.l.b16 %v877
      %v963 = vunpack.c.h.b16 %v877
      %v964 = vunpack.c.l.b16 %v878
      %v965 = vunpack.c.h.b16 %v878
      %v966 = vunpack.c.l.b16 %v879
      %v967 = vunpack.c.h.b16 %v879
      %v968 = vunpack.c.l.b16 %v880
      %v969 = vunpack.c.h.b16 %v880
      %v970 = vunpack.c.l.b16 %v881
      %v971 = vunpack.c.h.b16 %v881
      %v972 = vunpack.c.l.b16 %v882
      %v973 = vunpack.c.h.b16 %v882
      %v974 = vunpack.c.l.b16 %v883
      %v975 = vunpack.c.h.b16 %v883
      %v976 = vunpack.c.l.b16 %v884
      %v977 = vunpack.c.h.b16 %v884
      %v978 = vunpack.c.l.b16 %v885
      %v979 = vunpack.c.h.b16 %v885
      %v980 = vunpack.c.l.b16 %v886
      %v981 = vunpack.c.h.b16 %v886
      %v982 = vunpack.c.l.b16 %v887
      %v983 = vunpack.c.h.b16 %v887
      %v984 = vpack.c.b16 %v922, %v920
      %v985 = vpack.c.b16 %v923, %v921
      %v986 = vpack.c.b16 %v926, %v924
      %v987 = vpack.c.b16 %v927, %v925
      %v988 = vpack.c.b16 %v930, %v928
      %v989 = vpack.c.b16 %v931, %v929
      %v990 = vpack.c.b16 %v934, %v932
      %v991 = vpack.c.b16 %v935, %v933
      %v992 = vpack.c.b16 %v938, %v936
      %v993 = vpack.c.b16 %v939, %v937
      %v994 = vpack.c.b16 %v942, %v940
      %v995 = vpack.c.b16 %v943, %v941
      %v996 = vpack.c.b16 %v946, %v944
      %v997 = vpack.c.b16 %v947, %v945
      %v998 = vpack.c.b16 %v950, %v948
      %v999 = vpack.c.b16 %v951, %v949
      %v1000 = vpack.c.b16 %v954, %v952
      %v1001 = vpack.c.b16 %v955, %v953
      %v1002 = vpack.c.b16 %v958, %v956
      %v1003 = vpack.c.b16 %v959, %v957
      %v1004 = vpack.c.b16 %v962, %v960
      %v1005 = vpack.c.b16 %v963, %v961
      %v1006 = vpack.c.b16 %v966, %v964
      %v1007 = vpack.c.b16 %v967, %v965
      %v1008 = vpack.c.b16 %v970, %v968
      %v1009 = vpack.c.b16 %v971, %v969
      %v1010 = vpack.c.b16 %v974, %v972
      %v1011 = vpack.c.b16 %v975, %v973
      %v1012 = vpack.c.b16 %v978, %v976
      %v1013 = vpack.c.b16 %v979, %v977
      %v1014 = vpack.c.b16 %v982, %v980
      %v1015 = vpack.c.b16 %v983, %v981
      %1048 = vmatprep.subr.bf16.mxu0 %v985
      %1049 = vmatpush1.bf16.msra.mxu0 %v984
      %1050 = vmatprep.subr.bf16.mxu0 %v987
      %1051 = vmatpush1.bf16.msra.mxu0 %v986
      %1052 = vmatprep.subr.bf16.mxu0 %v989
      %1053 = vmatpush1.bf16.msra.mxu0 %v988
      %1054 = vmatprep.subr.bf16.mxu0 %v991
      %1055 = vmatpush1.bf16.msra.mxu0 %v990
      %1056 = vmatprep.subr.bf16.mxu0 %v993
      %1057 = vmatpush1.bf16.msra.mxu0 %v992
      %1058 = vmatprep.subr.bf16.mxu0 %v995
      %1059 = vmatpush1.bf16.msra.mxu0 %v994
      %1060 = vmatprep.subr.bf16.mxu0 %v997
      %1061 = vmatpush1.bf16.msra.mxu0 %v996
      %1062 = vmatprep.subr.bf16.mxu0 %v999
      %1063 = vmatpush1.bf16.msra.mxu0 %v998
      %1064 = vmatprep.subr.bf16.mxu0 %v1001
      %1065 = vmatpush1.bf16.msra.mxu0 %v1000
      %1066 = vmatprep.subr.bf16.mxu0 %v1003
      %1067 = vmatpush1.bf16.msra.mxu0 %v1002
      %1068 = vmatprep.subr.bf16.mxu0 %v1005
      %1069 = vmatpush1.bf16.msra.mxu0 %v1004
      %1070 = vmatprep.subr.bf16.mxu0 %v1007
      %1071 = vmatpush1.bf16.msra.mxu0 %v1006
      %1072 = vmatprep.subr.bf16.mxu0 %v1009
      %1073 = vmatpush1.bf16.msra.mxu0 %v1008
      %1074 = vmatprep.subr.bf16.mxu0 %v1011
      %1075 = vmatpush1.bf16.msra.mxu0 %v1010
      %1076 = vmatprep.subr.bf16.mxu0 %v1013
      %1077 = vmatpush1.bf16.msra.mxu0 %v1012
      %1078 = vmatprep.subr.bf16.mxu0 %v1015
      %1079 = vmatpush1.bf16.msra.mxu0 %v1014
      %1080 = vmatprep.mubr.bf16.mxu0 %v823
      %1081 = vmatmul.mubr.bf16.gmra.mrb[0].mxu0 %v822
      %v1082 = vpop.f32.mrb[0].mxu0
      %v1083 = vadd.f32 0.0, %v1082
      %v1084 = vpop.f32.mrb[0].mxu0
      %v1085 = vadd.f32 0.0, %v1084
      %v1086 = vpop.f32.mrb[0].mxu0
      %v1087 = vpop.f32.mrb[0].mxu0
      %1088 = vdwg.mxu0
      %v1121 = vunpack.c.l.b16 %v824
      %v1122 = vunpack.c.h.b16 %v824
      %v1123 = vunpack.c.l.b16 %v825
      %v1124 = vunpack.c.h.b16 %v825
      %v1125 = vunpack.c.l.b16 %v826
      %v1126 = vunpack.c.h.b16 %v826
      %v1127 = vunpack.c.l.b16 %v827
      %v1128 = vunpack.c.h.b16 %v827
      %v1129 = vunpack.c.l.b16 %v828
      %v1130 = vunpack.c.h.b16 %v828
      %v1131 = vunpack.c.l.b16 %v829
      %v1132 = vunpack.c.h.b16 %v829
      %v1133 = vunpack.c.l.b16 %v830
      %v1134 = vunpack.c.h.b16 %v830
      %v1135 = vunpack.c.l.b16 %v831
      %v1136 = vunpack.c.h.b16 %v831
      %v1137 = vunpack.c.l.b16 %v832
      %v1138 = vunpack.c.h.b16 %v832
      %v1139 = vunpack.c.l.b16 %v833
      %v1140 = vunpack.c.h.b16 %v833
      %v1141 = vunpack.c.l.b16 %v834
      %v1142 = vunpack.c.h.b16 %v834
      %v1143 = vunpack.c.l.b16 %v835
      %v1144 = vunpack.c.h.b16 %v835
      %v1145 = vunpack.c.l.b16 %v836
      %v1146 = vunpack.c.h.b16 %v836
      %v1147 = vunpack.c.l.b16 %v837
      %v1148 = vunpack.c.h.b16 %v837
      %v1149 = vunpack.c.l.b16 %v838
      %v1150 = vunpack.c.h.b16 %v838
      %v1151 = vunpack.c.l.b16 %v839
      %v1152 = vunpack.c.h.b16 %v839
      %v1153 = vunpack.c.l.b16 %v840
      %v1154 = vunpack.c.h.b16 %v840
      %v1155 = vunpack.c.l.b16 %v841
      %v1156 = vunpack.c.h.b16 %v841
      %v1157 = vunpack.c.l.b16 %v842
      %v1158 = vunpack.c.h.b16 %v842
      %v1159 = vunpack.c.l.b16 %v843
      %v1160 = vunpack.c.h.b16 %v843
      %v1161 = vunpack.c.l.b16 %v844
      %v1162 = vunpack.c.h.b16 %v844
      %v1163 = vunpack.c.l.b16 %v845
      %v1164 = vunpack.c.h.b16 %v845
      %v1165 = vunpack.c.l.b16 %v846
      %v1166 = vunpack.c.h.b16 %v846
      %v1167 = vunpack.c.l.b16 %v847
      %v1168 = vunpack.c.h.b16 %v847
      %v1169 = vunpack.c.l.b16 %v848
      %v1170 = vunpack.c.h.b16 %v848
      %v1171 = vunpack.c.l.b16 %v849
      %v1172 = vunpack.c.h.b16 %v849
      %v1173 = vunpack.c.l.b16 %v850
      %v1174 = vunpack.c.h.b16 %v850
      %v1175 = vunpack.c.l.b16 %v851
      %v1176 = vunpack.c.h.b16 %v851
      %v1177 = vunpack.c.l.b16 %v852
      %v1178 = vunpack.c.h.b16 %v852
      %v1179 = vunpack.c.l.b16 %v853
      %v1180 = vunpack.c.h.b16 %v853
      %v1181 = vunpack.c.l.b16 %v854
      %v1182 = vunpack.c.h.b16 %v854
      %v1183 = vunpack.c.l.b16 %v855
      %v1184 = vunpack.c.h.b16 %v855
      %v1185 = vpack.c.b16 %v1123, %v1121
      %v1186 = vpack.c.b16 %v1124, %v1122
      %v1187 = vpack.c.b16 %v1127, %v1125
      %v1188 = vpack.c.b16 %v1128, %v1126
      %v1189 = vpack.c.b16 %v1131, %v1129
      %v1190 = vpack.c.b16 %v1132, %v1130
      %v1191 = vpack.c.b16 %v1135, %v1133
      %v1192 = vpack.c.b16 %v1136, %v1134
      %v1193 = vpack.c.b16 %v1139, %v1137
      %v1194 = vpack.c.b16 %v1140, %v1138
      %v1195 = vpack.c.b16 %v1143, %v1141
      %v1196 = vpack.c.b16 %v1144, %v1142
      %v1197 = vpack.c.b16 %v1147, %v1145
      %v1198 = vpack.c.b16 %v1148, %v1146
      %v1199 = vpack.c.b16 %v1151, %v1149
      %v1200 = vpack.c.b16 %v1152, %v1150
      %v1201 = vpack.c.b16 %v1155, %v1153
      %v1202 = vpack.c.b16 %v1156, %v1154
      %v1203 = vpack.c.b16 %v1159, %v1157
      %v1204 = vpack.c.b16 %v1160, %v1158
      %v1205 = vpack.c.b16 %v1163, %v1161
      %v1206 = vpack.c.b16 %v1164, %v1162
      %v1207 = vpack.c.b16 %v1167, %v1165
      %v1208 = vpack.c.b16 %v1168, %v1166
      %v1209 = vpack.c.b16 %v1171, %v1169
      %v1210 = vpack.c.b16 %v1172, %v1170
      %v1211 = vpack.c.b16 %v1175, %v1173
      %v1212 = vpack.c.b16 %v1176, %v1174
      %v1213 = vpack.c.b16 %v1179, %v1177
      %v1214 = vpack.c.b16 %v1180, %v1178
      %v1215 = vpack.c.b16 %v1183, %v1181
      %v1216 = vpack.c.b16 %v1184, %v1182
      %1249 = vmatprep.subr.bf16.mxu0 %v1186
      %1250 = vmatpush1.bf16.msra.mxu0 %v1185
      %1251 = vmatprep.subr.bf16.mxu0 %v1188
      %1252 = vmatpush1.bf16.msra.mxu0 %v1187
      %1253 = vmatprep.subr.bf16.mxu0 %v1190
      %1254 = vmatpush1.bf16.msra.mxu0 %v1189
      %1255 = vmatprep.subr.bf16.mxu0 %v1192
      %1256 = vmatpush1.bf16.msra.mxu0 %v1191
      %1257 = vmatprep.subr.bf16.mxu0 %v1194
      %1258 = vmatpush1.bf16.msra.mxu0 %v1193
      %1259 = vmatprep.subr.bf16.mxu0 %v1196
      %1260 = vmatpush1.bf16.msra.mxu0 %v1195
      %1261 = vmatprep.subr.bf16.mxu0 %v1198
      %1262 = vmatpush1.bf16.msra.mxu0 %v1197
      %1263 = vmatprep.subr.bf16.mxu0 %v1200
      %1264 = vmatpush1.bf16.msra.mxu0 %v1199
      %1265 = vmatprep.subr.bf16.mxu0 %v1202
      %1266 = vmatpush1.bf16.msra.mxu0 %v1201
      %1267 = vmatprep.subr.bf16.mxu0 %v1204
      %1268 = vmatpush1.bf16.msra.mxu0 %v1203
      %1269 = vmatprep.subr.bf16.mxu0 %v1206
      %1270 = vmatpush1.bf16.msra.mxu0 %v1205
      %1271 = vmatprep.subr.bf16.mxu0 %v1208
      %1272 = vmatpush1.bf16.msra.mxu0 %v1207
      %1273 = vmatprep.subr.bf16.mxu0 %v1210
      %1274 = vmatpush1.bf16.msra.mxu0 %v1209
      %1275 = vmatprep.subr.bf16.mxu0 %v1212
      %1276 = vmatpush1.bf16.msra.mxu0 %v1211
      %1277 = vmatprep.subr.bf16.mxu0 %v1214
      %1278 = vmatpush1.bf16.msra.mxu0 %v1213
      %1279 = vmatprep.subr.bf16.mxu0 %v1216
      %1280 = vmatpush1.bf16.msra.mxu0 %v1215
      %1281 = vmatprep.mubr.bf16.mxu0 %v803
      %1282 = vmatmul.mubr.bf16.gmra.mrb[0].mxu0 %v802
      %v1283 = vpop.f32.mrb[0].mxu0
      %v1284 = vadd.f32 %v1083, %v1283
      %v1285 = vpop.f32.mrb[0].mxu0
      %v1286 = vadd.f32 %v1085, %v1285
      %v1287 = vpop.f32.mrb[0].mxu0
      %v1288 = vpop.f32.mrb[0].mxu0
      %1289 = vdwg.mxu0
      %v1290 = vsub.f32 0.0, %v1284
      %v1291 = vsub.f32 0.0, %v1286
      %v1292 = vmul.f32 %v1290, 1.442695
      %v1293 = vpow.pop %v1292
      %v1294 = vmul.f32 %v1291, 1.442695
      %v1295 = vpow.pop %v1294
      %v1296 = vadd.f32 %v1293, 1.0
      %v1297 = vadd.f32 %v1295, 1.0
      %v1298 = vrcp.pop %v1296
      %v1299 = vrcp.pop %v1297
      %v1300 = vlaneseq
      %v1301 = vshrl.u32 %v1300, 7
      %v1302 = vsub.s32 0, %v1301
      %v1303 = vrot.slane %v1298, %v1302
      %v1304 = vlaneseq
      %v1305 = vshrl.u32 %v1304, 7
      %v1306 = vsub.s32 0, %v1305
      %v1307 = vrot.slane %v1299, %v1306
      %v1308 = vmul.f32 %v773, %v1303
      %v1309 = vmul.f32 %v774, %v1307
      %v1310 = vmul.f32 %v775, %v1303
      %v1311 = vmul.f32 %v776, %v1307
      %v1312 = vmul.f32 %v777, %v1303
      %v1313 = vmul.f32 %v778, %v1307
      %v1314 = vmul.f32 %v779, %v1303
      %v1315 = vmul.f32 %v780, %v1307
      %1316 = vst [vmem:[%s278] sm:$0xff] %v1308
      %1317 = vst [vmem:[%s278 + $0x8] sm:$0xff] %v1309
      %1318 = vst [vmem:[%s278 + $0x10] sm:$0xff] %v1310
      %1319 = vst [vmem:[%s278 + $0x18] sm:$0xff] %v1311
      %1320 = vst [vmem:[%s278 + $0x20] sm:$0xff] %v1312
      %1321 = vst [vmem:[%s278 + $0x28] sm:$0xff] %v1313
      %1322 = vst [vmem:[%s278 + $0x30] sm:$0xff] %v1314
      %1323 = vst [vmem:[%s278 + $0x38] sm:$0xff] %v1315
      %p1324 = scmp.lt.s32.totalorder %s18, 1
      %s1325 = scalar_select %p1324, %s18, 1
      %s1326 = smul.addr %s1325, 8
      %s1327 = smul.addr %s1326, 8
      %s1328 = scalar_lea.vmem %s7, %s1327
      // Predicated region
      $region49: #{multiscale_feature_extractor.3} parent=47 // pred_check
        %p1329 = pneg %p188
      $region50: #{multiscale_feature_extractor.3} parent=47 // pred_check_branch
        %1331 = sbr.rel (%p1329) target = $region52
      $region51: #{multiscale_feature_extractor.3} parent=47 // pred_region
        _
      $region52: #{multiscale_feature_extractor.3} parent=47 // pred_fallthru
        _
    $region48: #{multiscale_feature_extractor.3} parent=5 // pred_fallthru
      _
    %p1332 = scmp.le.s32.totalorder 2, %s13
    // Predicated region
    $region53: #{multiscale_feature_extractor.3} parent=5 // pred_check
      %p1333 = pneg %p1332
    $region54: #{multiscale_feature_extractor.3} parent=5 // pred_check_branch
      %1335 = sbr.rel (%p1333) target = $region56
    $region55: #{multiscale_feature_extractor.3} parent=5 // pred_region
      %s1336 = ssub.s32 %s13, 2
      // Predicated region
      $region57: #{multiscale_feature_extractor.3} parent=55 // pred_check
        %p1337 = pneg %p194
      $region58: #{multiscale_feature_extractor.3} parent=55 // pred_check_branch
        %1339 = sbr.rel (%p1337) target = $region60
      $region59: #{multiscale_feature_extractor.3} parent=55 // pred_region
        %p1340 = scmp.lt.s32.totalorder %s19, 1
        %s1341 = scalar_select %p1340, %s19, 1
        %s1342 = smul.addr %s1341, 8
        %s1343 = smul.addr %s1342, 8
        %s1344 = scalar_lea.vmem %s7, %s1343
      $region60: #{multiscale_feature_extractor.3} parent=55 // pred_fallthru
        _
    $region56: #{multiscale_feature_extractor.3} parent=5 // pred_fallthru
      _
  $region6: #{multiscale_feature_extractor.3} parent=0 // loop_footer
    %s17 = sadd.s32 1, %s13
  $region7: #{multiscale_feature_extractor.3} parent=0 // loop_footer_branch
    %12 = sbr.rel target = $region3
  $region8: #{multiscale_feature_extractor.3} parent=0 // loop_exit
    _

</llo_original>
